<compile_context>
chip_gen: v5e
topology: v5e:2x2
jax: 0.10.0
libtpu: 0.0.40
codegen_flags: <defaults>
</compile_context>

<pallas_src>
import functools
import re

import numpy as np
import jax
import jax.numpy as jnp
from jax import lax
from jax.experimental import pallas as pl
from jax.experimental.pallas import tpu as pltpu

NUM_CLASSES = 12  # the PyTorch module loops over class ids 1..11


def _tpu_generation():
    """Best-effort TPU generation (4, 5, 6, 7, ...) or None if unknown."""
    try:
        kind = jax.devices()[0].device_kind
    except Exception:
        return None
    m = re.search(r"(\d+)", kind)
    return int(m.group(1)) if m else None


def _c_net_kernel(ghat_ref, rhat_ref, img_ref, rcl_ref, gcl_ref, out_ref,
                  acc_ref, *, exp_dtype):
    k = pl.program_id(2)

    @pl.when(k == 0)
    def _init():
        acc_ref[...] = jnp.zeros_like(acc_ref)

    # cosine-similarity correlation on the MXU: bf16 operands, f32 accumulate
    corr = lax.dot_general(ghat_ref[...], rhat_ref[...],
                           (((1,), (0,)), ((), ())),
                           preferred_element_type=jnp.float32)      # (TQ, TK)
    # keep only rgb columns whose class matches this gray pixel's (valid)
    # class; corr is bounded in [-1, 1] so no row-max is needed and the -30
    # bias drives excluded columns to ~1e-13 (negligible vs. exp(-1)).
    match = gcl_ref[...] == rcl_ref[...]                            # (TQ,1)==(1,TK)
    e = jnp.exp(jnp.where(match, corr, jnp.float32(-30.0)).astype(exp_dtype))
    e = e.astype(jnp.bfloat16)
    # one matmul: cols 0..2 = unnormalized colors, col 3 = softmax denominator
    acc_ref[...] += lax.dot_general(e, img_ref[...],
                                    (((1,), (0,)), ((), ())),
                                    preferred_element_type=jnp.float32)  # (TQ,4)

    @pl.when(k == pl.num_programs(2) - 1)
    def _finalize():
        acc = acc_ref[...]
        denom = jnp.maximum(acc[:, 3:4], jnp.float32(1e-30))
        colorized = acc[:, 0:3] * pl.reciprocal(denom, approx=True)   # (TQ, 3)
        processed = gcl_ref[...] > 0.0                                # (TQ, 1)
        out_ref[...] = jnp.where(processed, colorized, jnp.float32(-1.0))


def c_net_forward(gray_feature, rgb_feature, rgb_image, gray_label, rgb_label):
    B, C, H, W = gray_feature.shape
    n_cls = gray_label.shape[1]
    assert n_cls >= NUM_CLASSES, "one-hot labels must have >= 12 classes"
    N = H * W
    Np = ((N + 127) // 128) * 128          # lane-dense padding

    f32 = jnp.float32
    bf16 = jnp.bfloat16
    gf = gray_feature.reshape(B, C, N).astype(f32)
    rf = rgb_feature.reshape(B, C, N).astype(f32)
    img = rgb_image.reshape(B, 3, N).astype(f32)
    gl = gray_label.reshape(B, n_cls, N).astype(f32)[:, :NUM_CLASSES]
    rl = rgb_label.reshape(B, n_cls, N).astype(f32)[:, :NUM_CLASSES]

    # per-(batch, class) mask sums; both sides need > 1 pixel (PyTorch `continue`)
    gs = jnp.sum(gl, axis=2)                                    # (B, 12)
    rs = jnp.sum(rl, axis=2)
    valid = ((gs > 1.5) & (rs > 1.5)).astype(f32)
    valid = valid.at[:, 0].set(0.0)                             # class 0 skipped

    # per-(batch, class) masked channel means, scattered back to pixel space
    mu_g = jnp.einsum('bcn,bkn->bkc', gf, gl) / jnp.maximum(gs, 1.0)[:, :, None]
    mu_r = jnp.einsum('bcn,bkn->bkc', rf, rl) / jnp.maximum(rs, 1.0)[:, :, None]
    mu_g_pix = jnp.einsum('bkn,bkc->bcn', gl, mu_g)             # (B, C, N)
    mu_r_pix = jnp.einsum('bkn,bkc->bcn', rl, mu_r)

    # per-pixel centered + channel-L2-normalized features (f32 once, bf16 store)
    gbar = gf - mu_g_pix
    ghat = gbar / jnp.maximum(
        jnp.sqrt(jnp.sum(gbar * gbar, axis=1, keepdims=True)), 1e-12)
    rbar = rf - mu_r_pix
    rhat = rbar / jnp.maximum(
        jnp.sqrt(jnp.sum(rbar * rbar, axis=1, keepdims=True)), 1e-12)

    # float class codes; gray code is -1 for class-0 / invalid classes so it
    # doubles as the masked_scatter write mask.
    cls_ids = jnp.arange(NUM_CLASSES, dtype=f32)
    gcls = jnp.einsum('bkn,k->bn', gl, cls_ids)                 # (B, N)
    rcls = jnp.einsum('bkn,k->bn', rl, cls_ids)
    g_ok = jnp.einsum('bkn,bk->bn', gl, valid)
    gcode = jnp.where(g_ok > 0.5, gcls, -1.0)

    pad = Np - N

    def pad_last(x, value=0.0):
        return x if pad == 0 else jnp.pad(
            x, ((0, 0), (0, 0), (0, pad)), constant_values=value)

    ghat_t = jnp.swapaxes(pad_last(ghat), 1, 2).astype(bf16)         # (B, Np, C)
    rhat_p = pad_last(rhat).astype(bf16)                             # (B, C, Np)
    # rgb image + constant ones row: colors and denominator from one matmul;
    # stored pre-transposed so the big exp() operand is never transposed.
    img4 = jnp.concatenate([img, jnp.ones((B, 1, N), f32)], axis=1)
    img4_t = jnp.swapaxes(pad_last(img4), 1, 2).astype(bf16)         # (B, Np, 4)
    gcode_t = jnp.swapaxes(pad_last(gcode[:, None, :], -1.0), 1, 2)  # (B, Np, 1)
    rcode_p = pad_last(rcls[:, None, :], -2.0)                       # (B, 1, Np)

    gen = _tpu_generation()
    exp_dtype = bf16 if (gen is not None and gen >= 6) else f32  # no bf16 EUP on v5e
    if gen is None:
        vmem_limit = None
    elif gen >= 7:
        vmem_limit = 48 * 1024 * 1024      # v7x: 64 MiB per-TC physical VMEM
    else:
        vmem_limit = 64 * 1024 * 1024      # v5e / v6e: 128 MiB physical

    TQ = 256 if Np % 256 == 0 else 128     # gray-pixel (query) tile
    TK = next(t for t in (4096, 2048, 1024, 512, 256, 128) if Np % t == 0)
    n_q, n_k = Np // TQ, Np // TK

    kernel = functools.partial(_c_net_kernel, exp_dtype=exp_dtype)

    out = pl.pallas_call(
        kernel,
        out_shape=jax.ShapeDtypeStruct((B, Np, 3), f32),
        grid_spec=pltpu.PrefetchScalarGridSpec(
            num_scalar_prefetch=0,
            grid=(B, n_q, n_k),                   # rgb column axis innermost
            in_specs=[
                pl.BlockSpec((None, TQ, C), lambda b, q, k: (b, q, 0)),  # ghat^T
                pl.BlockSpec((None, C, TK), lambda b, q, k: (b, 0, k)),  # rhat
                pl.BlockSpec((None, TK, 4), lambda b, q, k: (b, k, 0)),  # [img;1]^T
                pl.BlockSpec((None, 1, TK), lambda b, q, k: (b, 0, k)),  # rgb class
                pl.BlockSpec((None, TQ, 1), lambda b, q, k: (b, q, 0)),  # gray class
            ],
            out_specs=pl.BlockSpec((None, TQ, 3), lambda b, q, k: (b, q, 0)),
            scratch_shapes=[pltpu.VMEM((TQ, 4), f32)],
        ),
        compiler_params=pltpu.CompilerParams(
            dimension_semantics=("parallel", "parallel", "arbitrary"),
            vmem_limit_bytes=vmem_limit),
    )(ghat_t, rhat_p, img4_t, rcode_p, gcode_t)

    return jnp.swapaxes(out[:, :N, :], 1, 2).reshape(B, 3, H, W)


def _reference(gf, rf, img, gl, rl):
    """NumPy mirror of the PyTorch masked_select/masked_scatter loop."""
    gf, rf, img, gl, rl = map(np.asarray, (gf, rf, img, gl, rl))
    B, C, H, W = gf.shape
    canvas = np.full_like(img, -1.0)
    for b in range(B):
        for cl in range(1, NUM_CLASSES):
            gm = gl[b, cl].astype(bool)
            rm = rl[b, cl].astype(bool)
            if gm.sum() <= 1 or rm.sum() <= 1:
                continue
            gmat = gf[b][:, gm]
            gbar = gmat - gmat.mean(1, keepdims=True)
            ghat = gbar / np.linalg.norm(gbar, axis=0, keepdims=True)
            rmat = rf[b][:, rm]
            rbar = rmat - rmat.mean(1, keepdims=True)
            rhat = rbar / np.linalg.norm(rbar, axis=0, keepdims=True)
            corr = ghat.T @ rhat
            corr = corr - corr.max(1, keepdims=True)
            e = np.exp(corr)
            attn = e / e.sum(1, keepdims=True)
            pix = img[b][:, rm]
            canvas[b][:, gm] = (attn @ pix.T).T
    return canvas


if __name__ == "__main__":
    key = jax.random.PRNGKey(0)
    B, C, H, W = 2, 32, 16, 16
    k1, k2, k3, k4, k5 = jax.random.split(key, 5)
    gray_feature = jax.random.normal(k1, (B, C, H, W), jnp.float32)
    rgb_feature = jax.random.normal(k2, (B, C, H, W), jnp.float32)
    rgb_image = jax.random.uniform(k3, (B, 3, H, W), jnp.float32)
    gray_ids = jax.random.randint(k4, (B, H, W), 0, NUM_CLASSES)
    rgb_ids = jax.random.randint(k5, (B, H, W), 0, NUM_CLASSES)
    # make class 5 empty in batch 0's gray labels to exercise the skip path
    gray_ids = gray_ids.at[0].set(jnp.where(gray_ids[0] == 5, 4, gray_ids[0]))

    gray_label = jnp.transpose(
        jax.nn.one_hot(gray_ids, NUM_CLASSES, dtype=jnp.float32), (0, 3, 1, 2))
    rgb_label = jnp.transpose(
        jax.nn.one_hot(rgb_ids, NUM_CLASSES, dtype=jnp.float32), (0, 3, 1, 2))

    out = c_net_forward(gray_feature, rgb_feature, rgb_image, gray_label,
                        rgb_label)
    out = jax.block_until_ready(out)

    ref = _reference(gray_feature, rgb_feature, rgb_image, gray_label, rgb_label)
    # tolerance reflects the intentional bf16 feature/exp storage, default-
    # precision bf16 MXU matmuls and the approximate softmax reciprocal
    np.testing.assert_allclose(np.asarray(out), ref, atol=2e-2, rtol=2e-2)
    print("KERNEL_OK")
</pallas_src>

<mosaic_0001>
module attributes {stable_mosaic.version = 11 : i64} {
  func.func @_c_net_kernel(%arg0: i32, %arg1: i32, %arg2: i32, %arg3: memref<1x256x32xbf16, #tpu.memory_space<vmem>>, %arg4: memref<1x32x256xbf16, #tpu.memory_space<vmem>>, %arg5: memref<1x256x4xbf16, #tpu.memory_space<vmem>>, %arg6: memref<1x1x256xf32, #tpu.memory_space<vmem>>, %arg7: memref<1x256x1xf32, #tpu.memory_space<vmem>>, %arg8: memref<1x256x3xf32, #tpu.memory_space<vmem>>, %arg9: memref<256x4xf32, #tpu.memory_space<vmem>>) attributes {dimension_semantics = [#tpu.dimension_semantics<parallel>, #tpu.dimension_semantics<parallel>, #tpu.dimension_semantics<arbitrary>], iteration_bounds = array<i64: 2, 1, 1>, scalar_prefetch = 0 : i64, scratch_operands = 1 : i64, tpu.core_type = #tpu.core_type<tc>, window_params = [{transform_indices = @transform_0, window_bounds = array<i64: 1, 256, 32>}, {transform_indices = @transform_1, window_bounds = array<i64: 1, 32, 256>}, {transform_indices = @transform_2, window_bounds = array<i64: 1, 256, 4>}, {transform_indices = @transform_3, window_bounds = array<i64: 1, 1, 256>}, {transform_indices = @transform_4, window_bounds = array<i64: 1, 256, 1>}, {transform_indices = @transform_5, window_bounds = array<i64: 1, 256, 3>}]} {
    %c0_i32 = arith.constant 0 : i32
    %0 = arith.cmpi eq, %arg2, %c0_i32 : i32
    %1 = arith.extui %0 : i1 to i32
    %c0_i32_0 = arith.constant 0 : i32
    %2 = arith.cmpi ne, %1, %c0_i32_0 : i32
    scf.if %2 {
      %cst_23 = arith.constant 0.000000e+00 : f32
      %28 = vector.broadcast %cst_23 : f32 to vector<256x4xf32>
      %c0_24 = arith.constant 0 : index
      %c0_25 = arith.constant 0 : index
      %29 = vector.load %arg9[%c0_24, %c0_25] : memref<256x4xf32, #tpu.memory_space<vmem>>, vector<256x4xf32>
      tpu.vector_store %arg9[%c0_24, %c0_25], %28 {strides = array<i32>} : memref<256x4xf32, #tpu.memory_space<vmem>>, vector<256x4xf32>,
    } else {
    }
    %c0 = arith.constant 0 : index
    %c0_1 = arith.constant 0 : index
    %c0_2 = arith.constant 0 : index
    %3 = vector.load %arg3[%c0, %c0_1, %c0_2] : memref<1x256x32xbf16, #tpu.memory_space<vmem>>, vector<1x256x32xbf16>
    %4 = vector.shape_cast %3 : vector<1x256x32xbf16> to vector<256x32xbf16>
    %c0_3 = arith.constant 0 : index
    %c0_4 = arith.constant 0 : index
    %c0_5 = arith.constant 0 : index
    %5 = vector.load %arg4[%c0_3, %c0_4, %c0_5] : memref<1x32x256xbf16, #tpu.memory_space<vmem>>, vector<1x32x256xbf16>
    %6 = vector.shape_cast %5 : vector<1x32x256xbf16> to vector<32x256xbf16>
    %cst = arith.constant dense<0.000000e+00> : vector<256x256xf32>
    %7 = tpu.matmul %4, %6, %cst {dimension_numbers = #tpu.dot_dimension_numbers<[1], [0], [0], [1], [0, 0, 1, 1], [], []>} : vector<256x32xbf16>, vector<32x256xbf16>, vector<256x256xf32> -> vector<256x256xf32>
    %c0_6 = arith.constant 0 : index
    %c0_7 = arith.constant 0 : index
    %c0_8 = arith.constant 0 : index
    %8 = vector.load %arg7[%c0_6, %c0_7, %c0_8] : memref<1x256x1xf32, #tpu.memory_space<vmem>>, vector<1x256x1xf32>
    %9 = vector.shape_cast %8 : vector<1x256x1xf32> to vector<256x1xf32>
    %c0_9 = arith.constant 0 : index
    %c0_10 = arith.constant 0 : index
    %c0_11 = arith.constant 0 : index
    %10 = vector.load %arg6[%c0_9, %c0_10, %c0_11] : memref<1x1x256xf32, #tpu.memory_space<vmem>>, vector<1x1x256xf32>
    %11 = vector.shape_cast %10 : vector<1x1x256xf32> to vector<1x256xf32>
    %12 = vector.broadcast %9 : vector<256x1xf32> to vector<256x256xf32>
    %13 = vector.broadcast %11 : vector<1x256xf32> to vector<256x256xf32>
    %14 = arith.cmpf oeq, %12, %13 : vector<256x256xf32>
    %cst_12 = arith.constant -3.000000e+01 : f32
    %15 = vector.broadcast %cst_12 : f32 to vector<256x256xf32>
    %16 = arith.select %14, %7, %15 : vector<256x256xi1>, vector<256x256xf32>
    %17 = math.exp %16 : vector<256x256xf32>
    %18 = arith.truncf %17 : vector<256x256xf32> to vector<256x256xbf16>
    %c0_13 = arith.constant 0 : index
    %c0_14 = arith.constant 0 : index
    %19 = vector.load %arg9[%c0_13, %c0_14] : memref<256x4xf32, #tpu.memory_space<vmem>>, vector<256x4xf32>
    %c0_15 = arith.constant 0 : index
    %c0_16 = arith.constant 0 : index
    %c0_17 = arith.constant 0 : index
    %20 = vector.load %arg5[%c0_15, %c0_16, %c0_17] : memref<1x256x4xbf16, #tpu.memory_space<vmem>>, vector<1x256x4xbf16>
    %21 = vector.shape_cast %20 : vector<1x256x4xbf16> to vector<256x4xbf16>
    %cst_18 = arith.constant dense<0.000000e+00> : vector<256x4xf32>
    %22 = tpu.matmul %18, %21, %cst_18 {dimension_numbers = #tpu.dot_dimension_numbers<[1], [0], [0], [1], [0, 0, 1, 1], [], []>} : vector<256x256xbf16>, vector<256x4xbf16>, vector<256x4xf32> -> vector<256x4xf32>
    %23 = arith.addf %19, %22 : vector<256x4xf32>
    %c0_19 = arith.constant 0 : index
    %c0_20 = arith.constant 0 : index
    %24 = vector.load %arg9[%c0_19, %c0_20] : memref<256x4xf32, #tpu.memory_space<vmem>>, vector<256x4xf32>
    tpu.vector_store %arg9[%c0_19, %c0_20], %23 {strides = array<i32>} : memref<256x4xf32, #tpu.memory_space<vmem>>, vector<256x4xf32>,
    %c0_i32_21 = arith.constant 0 : i32
    %25 = arith.cmpi eq, %arg2, %c0_i32_21 : i32
    %26 = arith.extui %25 : i1 to i32
    %c0_i32_22 = arith.constant 0 : i32
    %27 = arith.cmpi ne, %26, %c0_i32_22 : i32
    scf.if %27 {
      %c0_23 = arith.constant 0 : index
      %c0_24 = arith.constant 0 : index
      %28 = vector.load %arg9[%c0_23, %c0_24] : memref<256x4xf32, #tpu.memory_space<vmem>>, vector<256x4xf32>
      %29 = vector.extract_strided_slice %28 {offsets = [0, 3], sizes = [256, 1], strides = [1, 1]} : vector<256x4xf32> to vector<256x1xf32>
      %cst_25 = arith.constant 1.000000e-30 : f32
      %30 = vector.broadcast %cst_25 : f32 to vector<256x1xf32>
      %31 = arith.maximumf %29, %30 : vector<256x1xf32>
      %32 = vector.extract_strided_slice %28 {offsets = [0, 0], sizes = [256, 3], strides = [1, 1]} : vector<256x4xf32> to vector<256x3xf32>
      %33 = tpu.reciprocal %31 {approx = true} : vector<256x1xf32> -> vector<256x1xf32>
      %34 = vector.broadcast %33 : vector<256x1xf32> to vector<256x3xf32>
      %35 = arith.mulf %32, %34 : vector<256x3xf32>
      %c0_26 = arith.constant 0 : index
      %c0_27 = arith.constant 0 : index
      %c0_28 = arith.constant 0 : index
      %36 = vector.load %arg7[%c0_26, %c0_27, %c0_28] : memref<1x256x1xf32, #tpu.memory_space<vmem>>, vector<1x256x1xf32>
      %37 = vector.shape_cast %36 : vector<1x256x1xf32> to vector<256x1xf32>
      %cst_29 = arith.constant 0.000000e+00 : f32
      %38 = vector.broadcast %cst_29 : f32 to vector<256x1xf32>
      %39 = arith.cmpf ogt, %37, %38 : vector<256x1xf32>
      %cst_30 = arith.constant -1.000000e+00 : f32
      %40 = vector.shape_cast %39 : vector<256x1xi1> to vector<256x1xi1>
      %41 = vector.broadcast %40 : vector<256x1xi1> to vector<256x3xi1>
      %42 = vector.broadcast %cst_30 : f32 to vector<256x3xf32>
      %43 = arith.select %41, %35, %42 : vector<256x3xi1>, vector<256x3xf32>
      %c0_31 = arith.constant 0 : index
      %c0_32 = arith.constant 0 : index
      %c0_33 = arith.constant 0 : index
      %44 = vector.load %arg8[%c0_31, %c0_32, %c0_33] : memref<1x256x3xf32, #tpu.memory_space<vmem>>, vector<1x256x3xf32>
      %45 = vector.shape_cast %44 : vector<1x256x3xf32> to vector<256x3xf32>
      %46 = vector.shape_cast %43 : vector<256x3xf32> to vector<1x256x3xf32>
      tpu.vector_store %arg8[%c0_31, %c0_32, %c0_33], %46 {strides = array<i32>} : memref<1x256x3xf32, #tpu.memory_space<vmem>>, vector<1x256x3xf32>,
    } else {
    }
    return
  }
  func.func @transform_0(%arg0: i32, %arg1: i32, %arg2: i32) -> (i32, i32, i32) {
    %c0_i32 = arith.constant 0 : i32
    %c0_i32_0 = arith.constant 0 : i32
    return %arg0, %arg1, %c0_i32 : i32, i32, i32
  }
  func.func @transform_1(%arg0: i32, %arg1: i32, %arg2: i32) -> (i32, i32, i32) {
    %c0_i32 = arith.constant 0 : i32
    %c0_i32_0 = arith.constant 0 : i32
    return %arg0, %c0_i32, %arg2 : i32, i32, i32
  }
  func.func @transform_2(%arg0: i32, %arg1: i32, %arg2: i32) -> (i32, i32, i32) {
    %c0_i32 = arith.constant 0 : i32
    %c0_i32_0 = arith.constant 0 : i32
    return %arg0, %arg2, %c0_i32 : i32, i32, i32
  }
  func.func @transform_3(%arg0: i32, %arg1: i32, %arg2: i32) -> (i32, i32, i32) {
    %c0_i32 = arith.constant 0 : i32
    %c0_i32_0 = arith.constant 0 : i32
    return %arg0, %c0_i32, %arg2 : i32, i32, i32
  }
  func.func @transform_4(%arg0: i32, %arg1: i32, %arg2: i32) -> (i32, i32, i32) {
    %c0_i32 = arith.constant 0 : i32
    %c0_i32_0 = arith.constant 0 : i32
    return %arg0, %arg1, %c0_i32 : i32, i32, i32
  }
  func.func @transform_5(%arg0: i32, %arg1: i32, %arg2: i32) -> (i32, i32, i32) {
    %c0_i32 = arith.constant 0 : i32
    %c0_i32_0 = arith.constant 0 : i32
    return %arg0, %arg1, %c0_i32 : i32, i32, i32
  }
}

</mosaic_0001>

<llo_original>
// kernel: tpu_custom_call.1
$region0: #{tpu_custom_call.1}
  #allocation0 [shape = 'u32[]', space=smem, size = 0x4, offset = 0x4, fixed_abs, tag = 'smem constant byte address 0x4 - core index']
  #allocation1 [shape = 'u32[72,128]{1,0:T(1,128)}', space=vmem, size = 0x9000, scoped, tag = 'internal scratch']
  #allocation2 [shape = 'f32[256,4]{1,0:T(8,128)}', space=vmem, size = 0x20000, scoped, tag = 'scratch operand']
  %s0 = inlined_call_operand.vmem [shape: bf16[2,256,32], index: 0, kind: input, shape index: {}]
  %s1 = inlined_call_operand.vmem [shape: bf16[2,32,256], index: 1, kind: input, shape index: {}]
  %s2 = inlined_call_operand.vmem [shape: bf16[2,256,4], index: 2, kind: input, shape index: {}]
  %s3 = inlined_call_operand.vmem [shape: f32[2,1,256], index: 3, kind: input, shape index: {}]
  %s4 = inlined_call_operand.vmem [shape: f32[2,256,1], index: 4, kind: input, shape index: {}]
  %s5 = inlined_call_operand.vmem [shape: f32[2,256,3], index: 5, kind: output, shape index: {}]
  %s6 = sld [smem:[#allocation0]]
  $region61: #{tpu_custom_call.1} parent=0
    _
  %s8 = ssub.s32 1, %s6
  %s9 = scalar_select 0, %s8, %s6
  loop: start=0, step=1, limit=4
  $region2: #{tpu_custom_call.1} parent=0 // loop_pre_header
    _
  $region3: #{tpu_custom_call.1} parent=0 // loop_header
    %s11 = sphi 0, %s15
    %p12 = scmp.ge.s32.totalorder %s11, 4
    %s18 = sphi 0, %s37
    %s19 = sphi 0, %s33
    %s20 = sphi 0, %s29
    %s21 = sphi 0, %s18
    %s22 = sphi 0, %s19
    %s23 = sphi 0, %s20
    %s24 = sphi 0, %s21
    %s25 = sphi 0, %s22
    %s26 = sphi 0, %s23
    %s42 = sphi 0, %s44
    %s45 = sphi 0, %s42
    %s46 = sphi 0, %s45
    %s62 = sphi 0, %s46
    %s70 = sphi 0, %s72
    %s73 = sphi 0, %s70
    %s74 = sphi 0, %s73
    %s90 = sphi 0, %s74
    %s98 = sphi 0, %s100
    %s101 = sphi 0, %s98
    %s102 = sphi 0, %s101
    %s118 = sphi 0, %s102
    %s126 = sphi 0, %s128
    %s129 = sphi 0, %s126
    %s130 = sphi 0, %s129
    %s146 = sphi 0, %s130
    %s154 = sphi 0, %s156
    %s157 = sphi 0, %s154
    %s158 = sphi 0, %s157
    %s174 = sphi 0, %s158
    %s182 = sphi 0, %s184
    %s185 = sphi 0, %s182
    %s186 = sphi 0, %s185
    %s202 = sphi 0, %s186
  $region4: #{tpu_custom_call.1} parent=0 // loop_header_branch
    %14 = sbr.rel (%p12) target = $region8
  $region5: #{tpu_custom_call.1} parent=0 // loop_body
    %s16 = ssub.s32 %s11, 1
    %s17 = ssub.s32 %s11, 2
    %s27 = sadd.s32 1, %s20
    %p28 = scmp.ge.s32.totalorder %s27, 1
    %s29 = scalar_select %p28, 0, %s27
    %s30 = sadd.s32 1, %s19
    %s31 = scalar_select %p28, %s30, %s19
    %p32 = scmp.ge.s32.totalorder %s31, 1
    %s33 = scalar_select %p32, 0, %s31
    %s34 = sadd.s32 1, %s18
    %s35 = scalar_select %p32, %s34, %s18
    %p36 = scmp.ge.s32.totalorder %s35, 2
    %s37 = scalar_select %p36, 0, %s35
    %s38 = ssub.s32 %s18, %s37
    %s39 = ssub.s32 %s19, %s33
    %s40 = sor.u32 %s38, %s39
    %p41 = scmp.eq.s32.totalorder %s40, 0
    %s43 = sadd.s32 %s42, 1
    %s44 = scalar_select %p41, %s42, %s43
    %p47 = pneg %p41
    %p48 = scmp.eq.s32.totalorder %s11, 1
    %p49 = por %p47, %p48
    %p50 = scmp.ne.s32.totalorder %s42, %s45
    %p51 = scmp.eq.s32.totalorder %s11, 0
    %p52 = por %p50, %p51
    %p53 = scmp.ne.s32.totalorder %s42, %s45
    %p54 = scmp.eq.s32.totalorder %s16, 1
    %p55 = por %p53, %p54
    %p56 = scmp.ne.s32.totalorder %s45, %s46
    %p57 = scmp.eq.s32.totalorder %s16, 0
    %p58 = por %p56, %p57
    %p59 = scmp.ne.s32.totalorder %s45, %s46
    %p60 = scmp.eq.s32.totalorder %s17, 1
    %p61 = por %p59, %p60
    %p63 = scmp.ne.s32.totalorder %s46, %s62
    %p64 = scmp.eq.s32.totalorder %s17, 0
    %p65 = por %p63, %p64
    %s66 = ssub.s32 %s18, %s37
    %s67 = ssub.s32 %s20, %s29
    %s68 = sor.u32 %s66, %s67
    %p69 = scmp.eq.s32.totalorder %s68, 0
    %s71 = sadd.s32 %s70, 1
    %s72 = scalar_select %p69, %s70, %s71
    %p75 = pneg %p69
    %p76 = scmp.eq.s32.totalorder %s11, 1
    %p77 = por %p75, %p76
    %p78 = scmp.ne.s32.totalorder %s70, %s73
    %p79 = scmp.eq.s32.totalorder %s11, 0
    %p80 = por %p78, %p79
    %p81 = scmp.ne.s32.totalorder %s70, %s73
    %p82 = scmp.eq.s32.totalorder %s16, 1
    %p83 = por %p81, %p82
    %p84 = scmp.ne.s32.totalorder %s73, %s74
    %p85 = scmp.eq.s32.totalorder %s16, 0
    %p86 = por %p84, %p85
    %p87 = scmp.ne.s32.totalorder %s73, %s74
    %p88 = scmp.eq.s32.totalorder %s17, 1
    %p89 = por %p87, %p88
    %p91 = scmp.ne.s32.totalorder %s74, %s90
    %p92 = scmp.eq.s32.totalorder %s17, 0
    %p93 = por %p91, %p92
    %s94 = ssub.s32 %s18, %s37
    %s95 = ssub.s32 %s20, %s29
    %s96 = sor.u32 %s94, %s95
    %p97 = scmp.eq.s32.totalorder %s96, 0
    %s99 = sadd.s32 %s98, 1
    %s100 = scalar_select %p97, %s98, %s99
    %p103 = pneg %p97
    %p104 = scmp.eq.s32.totalorder %s11, 1
    %p105 = por %p103, %p104
    %p106 = scmp.ne.s32.totalorder %s98, %s101
    %p107 = scmp.eq.s32.totalorder %s11, 0
    %p108 = por %p106, %p107
    %p109 = scmp.ne.s32.totalorder %s98, %s101
    %p110 = scmp.eq.s32.totalorder %s16, 1
    %p111 = por %p109, %p110
    %p112 = scmp.ne.s32.totalorder %s101, %s102
    %p113 = scmp.eq.s32.totalorder %s16, 0
    %p114 = por %p112, %p113
    %p115 = scmp.ne.s32.totalorder %s101, %s102
    %p116 = scmp.eq.s32.totalorder %s17, 1
    %p117 = por %p115, %p116
    %p119 = scmp.ne.s32.totalorder %s102, %s118
    %p120 = scmp.eq.s32.totalorder %s17, 0
    %p121 = por %p119, %p120
    %s122 = ssub.s32 %s18, %s37
    %s123 = ssub.s32 %s20, %s29
    %s124 = sor.u32 %s122, %s123
    %p125 = scmp.eq.s32.totalorder %s124, 0
    %s127 = sadd.s32 %s126, 1
    %s128 = scalar_select %p125, %s126, %s127
    %p131 = pneg %p125
    %p132 = scmp.eq.s32.totalorder %s11, 1
    %p133 = por %p131, %p132
    %p134 = scmp.ne.s32.totalorder %s126, %s129
    %p135 = scmp.eq.s32.totalorder %s11, 0
    %p136 = por %p134, %p135
    %p137 = scmp.ne.s32.totalorder %s126, %s129
    %p138 = scmp.eq.s32.totalorder %s16, 1
    %p139 = por %p137, %p138
    %p140 = scmp.ne.s32.totalorder %s129, %s130
    %p141 = scmp.eq.s32.totalorder %s16, 0
    %p142 = por %p140, %p141
    %p143 = scmp.ne.s32.totalorder %s129, %s130
    %p144 = scmp.eq.s32.totalorder %s17, 1
    %p145 = por %p143, %p144
    %p147 = scmp.ne.s32.totalorder %s130, %s146
    %p148 = scmp.eq.s32.totalorder %s17, 0
    %p149 = por %p147, %p148
    %s150 = ssub.s32 %s18, %s37
    %s151 = ssub.s32 %s19, %s33
    %s152 = sor.u32 %s150, %s151
    %p153 = scmp.eq.s32.totalorder %s152, 0
    %s155 = sadd.s32 %s154, 1
    %s156 = scalar_select %p153, %s154, %s155
    %p159 = pneg %p153
    %p160 = scmp.eq.s32.totalorder %s11, 1
    %p161 = por %p159, %p160
    %p162 = scmp.ne.s32.totalorder %s154, %s157
    %p163 = scmp.eq.s32.totalorder %s11, 0
    %p164 = por %p162, %p163
    %p165 = scmp.ne.s32.totalorder %s154, %s157
    %p166 = scmp.eq.s32.totalorder %s16, 1
    %p167 = por %p165, %p166
    %p168 = scmp.ne.s32.totalorder %s157, %s158
    %p169 = scmp.eq.s32.totalorder %s16, 0
    %p170 = por %p168, %p169
    %p171 = scmp.ne.s32.totalorder %s157, %s158
    %p172 = scmp.eq.s32.totalorder %s17, 1
    %p173 = por %p171, %p172
    %p175 = scmp.ne.s32.totalorder %s158, %s174
    %p176 = scmp.eq.s32.totalorder %s17, 0
    %p177 = por %p175, %p176
    %s178 = ssub.s32 %s18, %s37
    %s179 = ssub.s32 %s19, %s33
    %s180 = sor.u32 %s178, %s179
    %p181 = scmp.eq.s32.totalorder %s180, 0
    %s183 = sadd.s32 %s182, 1
    %s184 = scalar_select %p181, %s182, %s183
    %p187 = pneg %p181
    %p188 = scmp.eq.s32.totalorder %s11, 1
    %p189 = por %p187, %p188
    %p190 = scmp.ne.s32.totalorder %s182, %s185
    %p191 = scmp.eq.s32.totalorder %s11, 0
    %p192 = por %p190, %p191
    %p193 = scmp.ne.s32.totalorder %s182, %s185
    %p194 = scmp.eq.s32.totalorder %s16, 1
    %p195 = por %p193, %p194
    %p196 = scmp.ne.s32.totalorder %s185, %s186
    %p197 = scmp.eq.s32.totalorder %s16, 0
    %p198 = por %p196, %p197
    %p199 = scmp.ne.s32.totalorder %s185, %s186
    %p200 = scmp.eq.s32.totalorder %s17, 1
    %p201 = por %p199, %p200
    %p203 = scmp.ne.s32.totalorder %s186, %s202
    %p204 = scmp.eq.s32.totalorder %s17, 0
    %p205 = por %p203, %p204
    %p206 = scmp.le.s32.totalorder 1, %s11
    %p207 = scmp.lt.s32.totalorder %s11, 3
    %p208 = pnand %p206, %p207
    %p209 = pneg %p208
    // Predicated region
    $region9: #{tpu_custom_call.1} parent=5 // pred_check
      _
    $region10: #{tpu_custom_call.1} parent=5 // pred_check_branch
      %211 = sbr.rel (%p208) target = $region12
    $region11: #{tpu_custom_call.1} parent=5 // pred_region
      %s212 = ssub.s32 %s11, 1
    $region12: #{tpu_custom_call.1} parent=5 // pred_fallthru
      _
    %p213 = scmp.lt.s32.totalorder %s11, 2
    // Predicated region
    $region13: #{tpu_custom_call.1} parent=5 // pred_check
      %p214 = pneg %p213
    $region14: #{tpu_custom_call.1} parent=5 // pred_check_branch
      %216 = sbr.rel (%p214) target = $region16
    $region15: #{tpu_custom_call.1} parent=5 // pred_region
      // Predicated region
      $region17: #{tpu_custom_call.1} parent=15 // pred_check
        %p217 = pneg %p52
      $region18: #{tpu_custom_call.1} parent=15 // pred_check_branch
        %219 = sbr.rel (%p217) target = $region20
      $region19: #{tpu_custom_call.1} parent=15 // pred_region
        %s220 = smul.u32 32, %s19
        %p221 = scmp.lt.s32.totalorder %s18, 1
        %s222 = scalar_select %p221, %s18, 1
        %p223 = scmp.lt.s32.totalorder %s220, 31
        %s224 = scalar_select %p223, %s220, 31
        %s225 = smul.addr %s222, 32
        %s226 = sadd.s32 %s224, %s225
        %s227 = smul.addr %s226, 4
        %s228 = scalar_lea.vmem %s0, %s227
        %s229 = smul.u32 32, %s19
      $region20: #{tpu_custom_call.1} parent=15 // pred_fallthru
        _
      // Predicated region
      $region21: #{tpu_custom_call.1} parent=15 // pred_check
        %p230 = pneg %p80
      $region22: #{tpu_custom_call.1} parent=15 // pred_check_branch
        %232 = sbr.rel (%p230) target = $region24
      $region23: #{tpu_custom_call.1} parent=15 // pred_region
        %s233 = smul.u32 2, %s20
        %p234 = scmp.lt.s32.totalorder %s18, 1
        %s235 = scalar_select %p234, %s18, 1
        %p236 = scmp.lt.s32.totalorder %s233, 1
        %s237 = scalar_select %p236, %s233, 1
        %s238 = smul.addr %s235, 8
        %s239 = sadd.s32 %s237, %s238
        %s240 = smul.addr %s239, 4
        %s241 = scalar_lea.vmem %s1, %s240
        %s242 = smul.u32 2, %s20
      $region24: #{tpu_custom_call.1} parent=15 // pred_fallthru
        _
      // Predicated region
      $region25: #{tpu_custom_call.1} parent=15 // pred_check
        %p243 = pneg %p108
      $region26: #{tpu_custom_call.1} parent=15 // pred_check_branch
        %245 = sbr.rel (%p243) target = $region28
      $region27: #{tpu_custom_call.1} parent=15 // pred_region
        %s246 = smul.u32 32, %s20
        %p247 = scmp.lt.s32.totalorder %s18, 1
        %s248 = scalar_select %p247, %s18, 1
        %p249 = scmp.lt.s32.totalorder %s246, 31
        %s250 = scalar_select %p249, %s246, 31
        %s251 = smul.addr %s248, 32
        %s252 = sadd.s32 %s250, %s251
        %s253 = smul.addr %s252, 4
        %s254 = scalar_lea.vmem %s2, %s253
        %s255 = smul.u32 32, %s20
      $region28: #{tpu_custom_call.1} parent=15 // pred_fallthru
        _
      // Predicated region
      $region29: #{tpu_custom_call.1} parent=15 // pred_check
        %p256 = pneg %p136
      $region30: #{tpu_custom_call.1} parent=15 // pred_check_branch
        %258 = sbr.rel (%p256) target = $region32
      $region31: #{tpu_custom_call.1} parent=15 // pred_region
        %s259 = smul.u32 2, %s20
        %p260 = scmp.lt.s32.totalorder %s18, 1
        %s261 = scalar_select %p260, %s18, 1
        %p262 = scmp.lt.s32.totalorder %s259, 1
        %s263 = scalar_select %p262, %s259, 1
        %s264 = smul.addr %s261, 2
        %s265 = sadd.s32 %s263, %s264
        %s266 = scalar_lea.vmem %s3, %s265
        %s267 = smul.u32 2, %s20
      $region32: #{tpu_custom_call.1} parent=15 // pred_fallthru
        _
      // Predicated region
      $region33: #{tpu_custom_call.1} parent=15 // pred_check
        %p268 = pneg %p164
      $region34: #{tpu_custom_call.1} parent=15 // pred_check_branch
        %270 = sbr.rel (%p268) target = $region36
      $region35: #{tpu_custom_call.1} parent=15 // pred_region
        %s271 = smul.u32 32, %s19
        %p272 = scmp.lt.s32.totalorder %s18, 1
        %s273 = scalar_select %p272, %s18, 1
        %p274 = scmp.lt.s32.totalorder %s271, 31
        %s275 = scalar_select %p274, %s271, 31
        %s276 = smul.addr %s273, 32
        %s277 = sadd.s32 %s275, %s276
        %s278 = smul.addr %s277, 8
        %s279 = scalar_lea.vmem %s4, %s278
        %s280 = smul.u32 32, %s19
      $region36: #{tpu_custom_call.1} parent=15 // pred_fallthru
        _
    $region16: #{tpu_custom_call.1} parent=5 // pred_fallthru
      _
    %p281 = scmp.le.s32.totalorder 1, %s11
    %p282 = scmp.lt.s32.totalorder %s11, 3
    %p283 = pnand %p281, %p282
    %p284 = pneg %p283
    // Predicated region
    $region37: #{tpu_custom_call.1} parent=5 // pred_check
      _
    $region38: #{tpu_custom_call.1} parent=5 // pred_check_branch
      %286 = sbr.rel (%p283) target = $region40
    $region39: #{tpu_custom_call.1} parent=5 // pred_region
      %s287 = ssub.s32 %s11, 1
      %s288 = smul.u32 32, %s22
      %p289 = scmp.lt.s32.totalorder %s21, 1
      %s290 = scalar_select %p289, %s21, 1
      %p291 = scmp.lt.s32.totalorder %s288, 31
      %s292 = scalar_select %p291, %s288, 31
      %s293 = smul.addr %s290, 32
      %s294 = sadd.s32 %s292, %s293
      %s295 = smul.addr %s294, 4
      %s296 = scalar_lea.vmem %s0, %s295
      %p297 = pneg %p58
      %p298 = pneg %p55
      %s299 = smul.u32 2, %s23
      %p300 = scmp.lt.s32.totalorder %s21, 1
      %s301 = scalar_select %p300, %s21, 1
      %p302 = scmp.lt.s32.totalorder %s299, 1
      %s303 = scalar_select %p302, %s299, 1
      %s304 = smul.addr %s301, 8
      %s305 = sadd.s32 %s303, %s304
      %s306 = smul.addr %s305, 4
      %s307 = scalar_lea.vmem %s1, %s306
      %p308 = pneg %p86
      %p309 = pneg %p83
      %s310 = smul.u32 32, %s23
      %p311 = scmp.lt.s32.totalorder %s21, 1
      %s312 = scalar_select %p311, %s21, 1
      %p313 = scmp.lt.s32.totalorder %s310, 31
      %s314 = scalar_select %p313, %s310, 31
      %s315 = smul.addr %s312, 32
      %s316 = sadd.s32 %s314, %s315
      %s317 = smul.addr %s316, 4
      %s318 = scalar_lea.vmem %s2, %s317
      %p319 = pneg %p114
      %p320 = pneg %p111
      %s321 = smul.u32 2, %s23
      %p322 = scmp.lt.s32.totalorder %s21, 1
      %s323 = scalar_select %p322, %s21, 1
      %p324 = scmp.lt.s32.totalorder %s321, 1
      %s325 = scalar_select %p324, %s321, 1
      %s326 = smul.addr %s323, 2
      %s327 = sadd.s32 %s325, %s326
      %s328 = scalar_lea.vmem %s3, %s327
      %p329 = pneg %p142
      %p330 = pneg %p139
      %s331 = smul.u32 32, %s22
      %p332 = scmp.lt.s32.totalorder %s21, 1
      %s333 = scalar_select %p332, %s21, 1
      %p334 = scmp.lt.s32.totalorder %s331, 31
      %s335 = scalar_select %p334, %s331, 31
      %s336 = smul.addr %s333, 32
      %s337 = sadd.s32 %s335, %s336
      %s338 = smul.addr %s337, 8
      %s339 = scalar_lea.vmem %s4, %s338
      %p340 = pneg %p170
      %p341 = pneg %p167
      %p342 = pneg %p198
      %p343 = pneg %p195
      %s344 = smul.u32 32, %s22
      %p345 = scmp.lt.s32.totalorder %s21, 1
      %s346 = scalar_select %p345, %s21, 1
      %p347 = scmp.lt.s32.totalorder %s344, 31
      %s348 = scalar_select %p347, %s344, 31
      %s349 = smul.addr %s346, 32
      %s350 = sadd.s32 %s348, %s349
      %s351 = smul.addr %s350, 8
      %s352 = scalar_lea.vmem %s5, %s351
      %s353 = smul.u32 32, %s22
      %p354 = scmp.lt.s32.totalorder %s21, 1
      %s355 = scalar_select %p354, %s21, 1
      %p356 = scmp.lt.s32.totalorder %s353, 31
      %s357 = scalar_select %p356, %s353, 31
      %s358 = smul.addr %s355, 32
      %s359 = sadd.s32 %s357, %s358
      %s360 = smul.addr %s359, 4
      %s361 = scalar_lea.vmem %s0, %s360
      %s362 = smul.u32 32, %s22
      %s363 = smul.u32 2, %s23
      %p364 = scmp.lt.s32.totalorder %s21, 1
      %s365 = scalar_select %p364, %s21, 1
      %p366 = scmp.lt.s32.totalorder %s363, 1
      %s367 = scalar_select %p366, %s363, 1
      %s368 = smul.addr %s365, 8
      %s369 = sadd.s32 %s367, %s368
      %s370 = smul.addr %s369, 4
      %s371 = scalar_lea.vmem %s1, %s370
      %s372 = smul.u32 2, %s23
      %s373 = smul.u32 32, %s23
      %p374 = scmp.lt.s32.totalorder %s21, 1
      %s375 = scalar_select %p374, %s21, 1
      %p376 = scmp.lt.s32.totalorder %s373, 31
      %s377 = scalar_select %p376, %s373, 31
      %s378 = smul.addr %s375, 32
      %s379 = sadd.s32 %s377, %s378
      %s380 = smul.addr %s379, 4
      %s381 = scalar_lea.vmem %s2, %s380
      %s382 = smul.u32 32, %s23
      %s383 = smul.u32 2, %s23
      %p384 = scmp.lt.s32.totalorder %s21, 1
      %s385 = scalar_select %p384, %s21, 1
      %p386 = scmp.lt.s32.totalorder %s383, 1
      %s387 = scalar_select %p386, %s383, 1
      %s388 = smul.addr %s385, 2
      %s389 = sadd.s32 %s387, %s388
      %s390 = scalar_lea.vmem %s3, %s389
      %s391 = smul.u32 2, %s23
      %s392 = smul.u32 32, %s22
      %p393 = scmp.lt.s32.totalorder %s21, 1
      %s394 = scalar_select %p393, %s21, 1
      %p395 = scmp.lt.s32.totalorder %s392, 31
      %s396 = scalar_select %p395, %s392, 31
      %s397 = smul.addr %s394, 32
      %s398 = sadd.s32 %s396, %s397
      %s399 = smul.addr %s398, 8
      %s400 = scalar_lea.vmem %s4, %s399
      %s401 = smul.u32 32, %s22
      %s402 = smul.u32 32, %s22
      %p403 = scmp.lt.s32.totalorder %s21, 1
      %s404 = scalar_select %p403, %s21, 1
      %p405 = scmp.lt.s32.totalorder %s402, 31
      %s406 = scalar_select %p405, %s402, 31
      %s407 = smul.addr %s404, 32
      %s408 = sadd.s32 %s406, %s407
      %s409 = smul.addr %s408, 8
      %s410 = scalar_lea.vmem %s5, %s409
      %s411 = smul.u32 32, %s22
      %p413 = scmp.eq.s32.totalorder %s23, 0
      // Predicated region
      $region41: #{tpu_custom_call.1} parent=39 // pred_check
        %p414 = pneg %p413
      $region42: #{tpu_custom_call.1} parent=39 // pred_check_branch
        %416 = sbr.rel (%p414) target = $region44
      $region43: #{tpu_custom_call.1} parent=39 // pred_region
        %vm417 = vcmask 31744
        %418 = vst.msk [vmem:[#allocation2] sm:$0xff] %vm417, 0.0
        %419 = vst.msk [vmem:[#allocation2 + $0x8] sm:$0xff] %vm417, 0.0
        %420 = vst.msk [vmem:[#allocation2 + $0x10] sm:$0xff] %vm417, 0.0
        %421 = vst.msk [vmem:[#allocation2 + $0x18] sm:$0xff] %vm417, 0.0
        %422 = vst.msk [vmem:[#allocation2 + $0x20] sm:$0xff] %vm417, 0.0
        %423 = vst.msk [vmem:[#allocation2 + $0x28] sm:$0xff] %vm417, 0.0
        %424 = vst.msk [vmem:[#allocation2 + $0x30] sm:$0xff] %vm417, 0.0
        %425 = vst.msk [vmem:[#allocation2 + $0x38] sm:$0xff] %vm417, 0.0
        %426 = vst.msk [vmem:[#allocation2 + $0x40] sm:$0xff] %vm417, 0.0
        %427 = vst.msk [vmem:[#allocation2 + $0x48] sm:$0xff] %vm417, 0.0
        %428 = vst.msk [vmem:[#allocation2 + $0x50] sm:$0xff] %vm417, 0.0
        %429 = vst.msk [vmem:[#allocation2 + $0x58] sm:$0xff] %vm417, 0.0
        %430 = vst.msk [vmem:[#allocation2 + $0x60] sm:$0xff] %vm417, 0.0
        %431 = vst.msk [vmem:[#allocation2 + $0x68] sm:$0xff] %vm417, 0.0
        %432 = vst.msk [vmem:[#allocation2 + $0x70] sm:$0xff] %vm417, 0.0
        %433 = vst.msk [vmem:[#allocation2 + $0x78] sm:$0xff] %vm417, 0.0
        %434 = vst.msk [vmem:[#allocation2 + $0x80] sm:$0xff] %vm417, 0.0
        %435 = vst.msk [vmem:[#allocation2 + $0x88] sm:$0xff] %vm417, 0.0
        %436 = vst.msk [vmem:[#allocation2 + $0x90] sm:$0xff] %vm417, 0.0
        %437 = vst.msk [vmem:[#allocation2 + $0x98] sm:$0xff] %vm417, 0.0
        %438 = vst.msk [vmem:[#allocation2 + $0xa0] sm:$0xff] %vm417, 0.0
        %439 = vst.msk [vmem:[#allocation2 + $0xa8] sm:$0xff] %vm417, 0.0
        %440 = vst.msk [vmem:[#allocation2 + $0xb0] sm:$0xff] %vm417, 0.0
        %441 = vst.msk [vmem:[#allocation2 + $0xb8] sm:$0xff] %vm417, 0.0
        %442 = vst.msk [vmem:[#allocation2 + $0xc0] sm:$0xff] %vm417, 0.0
        %443 = vst.msk [vmem:[#allocation2 + $0xc8] sm:$0xff] %vm417, 0.0
        %444 = vst.msk [vmem:[#allocation2 + $0xd0] sm:$0xff] %vm417, 0.0
        %445 = vst.msk [vmem:[#allocation2 + $0xd8] sm:$0xff] %vm417, 0.0
        %446 = vst.msk [vmem:[#allocation2 + $0xe0] sm:$0xff] %vm417, 0.0
        %447 = vst.msk [vmem:[#allocation2 + $0xe8] sm:$0xff] %vm417, 0.0
        %448 = vst.msk [vmem:[#allocation2 + $0xf0] sm:$0xff] %vm417, 0.0
        %449 = vst.msk [vmem:[#allocation2 + $0xf8] sm:$0xff] %vm417, 0.0
      $region44: #{tpu_custom_call.1} parent=39 // pred_fallthru
        _
      %v450 = vld [vmem:[%s361] sm:$0xf]
      %v451 = vld [vmem:[%s361 + $0x4] sm:$0xf]
      %v452 = vld [vmem:[%s361 + $0x8] sm:$0xf]
      %v453 = vld [vmem:[%s361 + $0xc] sm:$0xf]
      %v454 = vld [vmem:[%s361 + $0x10] sm:$0xf]
      %v455 = vld [vmem:[%s361 + $0x14] sm:$0xf]
      %v456 = vld [vmem:[%s361 + $0x18] sm:$0xf]
      %v457 = vld [vmem:[%s361 + $0x1c] sm:$0xf]
      %v458 = vld [vmem:[%s361 + $0x20] sm:$0xf]
      %v459 = vld [vmem:[%s361 + $0x24] sm:$0xf]
      %v460 = vld [vmem:[%s361 + $0x28] sm:$0xf]
      %v461 = vld [vmem:[%s361 + $0x2c] sm:$0xf]
      %v462 = vld [vmem:[%s361 + $0x30] sm:$0xf]
      %v463 = vld [vmem:[%s361 + $0x34] sm:$0xf]
      %v464 = vld [vmem:[%s361 + $0x38] sm:$0xf]
      %v465 = vld [vmem:[%s361 + $0x3c] sm:$0xf]
      %v466 = vld [vmem:[%s361 + $0x40] sm:$0xf]
      %v467 = vld [vmem:[%s361 + $0x44] sm:$0xf]
      %v468 = vld [vmem:[%s361 + $0x48] sm:$0xf]
      %v469 = vld [vmem:[%s361 + $0x4c] sm:$0xf]
      %v470 = vld [vmem:[%s361 + $0x50] sm:$0xf]
      %v471 = vld [vmem:[%s361 + $0x54] sm:$0xf]
      %v472 = vld [vmem:[%s361 + $0x58] sm:$0xf]
      %v473 = vld [vmem:[%s361 + $0x5c] sm:$0xf]
      %v474 = vld [vmem:[%s361 + $0x60] sm:$0xf]
      %v475 = vld [vmem:[%s361 + $0x64] sm:$0xf]
      %v476 = vld [vmem:[%s361 + $0x68] sm:$0xf]
      %v477 = vld [vmem:[%s361 + $0x6c] sm:$0xf]
      %v478 = vld [vmem:[%s361 + $0x70] sm:$0xf]
      %v479 = vld [vmem:[%s361 + $0x74] sm:$0xf]
      %v480 = vld [vmem:[%s361 + $0x78] sm:$0xf]
      %v481 = vld [vmem:[%s361 + $0x7c] sm:$0xf]
      %v482 = vld [vmem:[%s371] sm:$0xff]
      %v483 = vld [vmem:[%s371 + $0x8] sm:$0xff]
      %v484 = vld [vmem:[%s371 + $0x10] sm:$0xff]
      %v485 = vld [vmem:[%s371 + $0x18] sm:$0xff]
      %v518 = vunpack.c.l.b16 %v450
      %v519 = vunpack.c.l.b16 %v451
      %v520 = vunpack.c.l.b16 %v452
      %v521 = vunpack.c.l.b16 %v453
      %v522 = vunpack.c.l.b16 %v454
      %v523 = vunpack.c.l.b16 %v455
      %v524 = vunpack.c.l.b16 %v456
      %v525 = vunpack.c.l.b16 %v457
      %v526 = vunpack.c.l.b16 %v458
      %v527 = vunpack.c.l.b16 %v459
      %v528 = vunpack.c.l.b16 %v460
      %v529 = vunpack.c.l.b16 %v461
      %v530 = vunpack.c.l.b16 %v462
      %v531 = vunpack.c.l.b16 %v463
      %v532 = vunpack.c.l.b16 %v464
      %v533 = vunpack.c.l.b16 %v465
      %v534 = vunpack.c.l.b16 %v466
      %v535 = vunpack.c.l.b16 %v467
      %v536 = vunpack.c.l.b16 %v468
      %v537 = vunpack.c.l.b16 %v469
      %v538 = vunpack.c.l.b16 %v470
      %v539 = vunpack.c.l.b16 %v471
      %v540 = vunpack.c.l.b16 %v472
      %v541 = vunpack.c.l.b16 %v473
      %v542 = vunpack.c.l.b16 %v474
      %v543 = vunpack.c.l.b16 %v475
      %v544 = vunpack.c.l.b16 %v476
      %v545 = vunpack.c.l.b16 %v477
      %v546 = vunpack.c.l.b16 %v478
      %v547 = vunpack.c.l.b16 %v479
      %v548 = vunpack.c.l.b16 %v480
      %v549 = vunpack.c.l.b16 %v481
      %v550 = vpack.c.b16 %v519, %v518
      %v551 = vpack.c.b16 %v521, %v520
      %v552 = vpack.c.b16 %v523, %v522
      %v553 = vpack.c.b16 %v525, %v524
      %v554 = vpack.c.b16 %v527, %v526
      %v555 = vpack.c.b16 %v529, %v528
      %v556 = vpack.c.b16 %v531, %v530
      %v557 = vpack.c.b16 %v533, %v532
      %v558 = vpack.c.b16 %v535, %v534
      %v559 = vpack.c.b16 %v537, %v536
      %v560 = vpack.c.b16 %v539, %v538
      %v561 = vpack.c.b16 %v541, %v540
      %v562 = vpack.c.b16 %v543, %v542
      %v563 = vpack.c.b16 %v545, %v544
      %v564 = vpack.c.b16 %v547, %v546
      %v565 = vpack.c.b16 %v549, %v548
      %v570 = vunpack.c.l.b16 %v482
      %v571 = vunpack.c.h.b16 %v482
      %v572 = vunpack.c.l.b16 %v483
      %v573 = vunpack.c.h.b16 %v483
      %v574 = vunpack.c.l.b16 %v484
      %v575 = vunpack.c.h.b16 %v484
      %v576 = vunpack.c.l.b16 %v485
      %v577 = vunpack.c.h.b16 %v485
      %v578 = vpack.c.b16 %v572, %v570
      %v579 = vpack.c.b16 %v573, %v571
      %v580 = vpack.c.b16 %v576, %v574
      %v581 = vpack.c.b16 %v577, %v575
      %vm586 = vcmask 261120
      %v588 = vsel %vm586, %v550, 0
      %v591 = vsel %vm586, %v551, 0
      %v594 = vsel %vm586, %v552, 0
      %v597 = vsel %vm586, %v553, 0
      %v600 = vsel %vm586, %v554, 0
      %v603 = vsel %vm586, %v555, 0
      %v606 = vsel %vm586, %v556, 0
      %v609 = vsel %vm586, %v557, 0
      %v612 = vsel %vm586, %v558, 0
      %v615 = vsel %vm586, %v559, 0
      %v618 = vsel %vm586, %v560, 0
      %v621 = vsel %vm586, %v561, 0
      %v624 = vsel %vm586, %v562, 0
      %v627 = vsel %vm586, %v563, 0
      %v630 = vsel %vm586, %v564, 0
      %v633 = vsel %vm586, %v565, 0
      %635 = vmatpush.bf16.msra.mxu0 0
      %636 = vmatpush.bf16.msra.mxu0 0
      %637 = vmatpush.bf16.msra.mxu0 0
      %638 = vmatpush.bf16.msra.mxu0 0
      %639 = vmatpush.bf16.msra.mxu0 0
      %640 = vmatpush.bf16.msra.mxu0 0
      %641 = vmatpush.bf16.msra.mxu0 %v580
      %642 = vmatpush.bf16.msra.mxu0 %v578
      %643 = vmatmul.bf16.gmra.mxu0 %v588
      %v644 = vpop.f32.mrf.mxu0
      %v645 = vadd.f32 0.0, %v644
      %v646 = vpop.f32.mrf.mxu0
      %v647 = vadd.f32 0.0, %v646
      %648 = vmatmul.bf16.gmra.mxu0 %v591
      %v649 = vpop.f32.mrf.mxu0
      %v650 = vadd.f32 0.0, %v649
      %v651 = vpop.f32.mrf.mxu0
      %v652 = vadd.f32 0.0, %v651
      %653 = vmatmul.bf16.gmra.mxu0 %v594
      %v654 = vpop.f32.mrf.mxu0
      %v655 = vadd.f32 0.0, %v654
      %v656 = vpop.f32.mrf.mxu0
      %v657 = vadd.f32 0.0, %v656
      %658 = vmatmul.bf16.gmra.mxu0 %v597
      %v659 = vpop.f32.mrf.mxu0
      %v660 = vadd.f32 0.0, %v659
      %v661 = vpop.f32.mrf.mxu0
      %v662 = vadd.f32 0.0, %v661
      %663 = vmatmul.bf16.gmra.mxu0 %v600
      %v664 = vpop.f32.mrf.mxu0
      %v665 = vadd.f32 0.0, %v664
      %v666 = vpop.f32.mrf.mxu0
      %v667 = vadd.f32 0.0, %v666
      %668 = vmatmul.bf16.gmra.mxu0 %v603
      %v669 = vpop.f32.mrf.mxu0
      %v670 = vadd.f32 0.0, %v669
      %v671 = vpop.f32.mrf.mxu0
      %v672 = vadd.f32 0.0, %v671
      %673 = vmatmul.bf16.gmra.mxu0 %v606
      %v674 = vpop.f32.mrf.mxu0
      %v675 = vadd.f32 0.0, %v674
      %v676 = vpop.f32.mrf.mxu0
      %v677 = vadd.f32 0.0, %v676
      %678 = vmatmul.bf16.gmra.mxu0 %v609
      %v679 = vpop.f32.mrf.mxu0
      %v680 = vadd.f32 0.0, %v679
      %v681 = vpop.f32.mrf.mxu0
      %v682 = vadd.f32 0.0, %v681
      %683 = vmatmul.bf16.gmra.mxu0 %v612
      %v684 = vpop.f32.mrf.mxu0
      %v685 = vadd.f32 0.0, %v684
      %v686 = vpop.f32.mrf.mxu0
      %v687 = vadd.f32 0.0, %v686
      %688 = vmatmul.bf16.gmra.mxu0 %v615
      %v689 = vpop.f32.mrf.mxu0
      %v690 = vadd.f32 0.0, %v689
      %v691 = vpop.f32.mrf.mxu0
      %v692 = vadd.f32 0.0, %v691
      %693 = vmatmul.bf16.gmra.mxu0 %v618
      %v694 = vpop.f32.mrf.mxu0
      %v695 = vadd.f32 0.0, %v694
      %v696 = vpop.f32.mrf.mxu0
      %v697 = vadd.f32 0.0, %v696
      %698 = vmatmul.bf16.gmra.mxu0 %v621
      %v699 = vpop.f32.mrf.mxu0
      %v700 = vadd.f32 0.0, %v699
      %v701 = vpop.f32.mrf.mxu0
      %v702 = vadd.f32 0.0, %v701
      %703 = vmatmul.bf16.gmra.mxu0 %v624
      %v704 = vpop.f32.mrf.mxu0
      %v705 = vadd.f32 0.0, %v704
      %v706 = vpop.f32.mrf.mxu0
      %v707 = vadd.f32 0.0, %v706
      %708 = vmatmul.bf16.gmra.mxu0 %v627
      %v709 = vpop.f32.mrf.mxu0
      %v710 = vadd.f32 0.0, %v709
      %v711 = vpop.f32.mrf.mxu0
      %v712 = vadd.f32 0.0, %v711
      %713 = vmatmul.bf16.gmra.mxu0 %v630
      %v714 = vpop.f32.mrf.mxu0
      %v715 = vadd.f32 0.0, %v714
      %v716 = vpop.f32.mrf.mxu0
      %v717 = vadd.f32 0.0, %v716
      %718 = vmatmul.bf16.gmra.mxu0 %v633
      %v719 = vpop.f32.mrf.mxu0
      %v720 = vadd.f32 0.0, %v719
      %v721 = vpop.f32.mrf.mxu0
      %v722 = vadd.f32 0.0, %v721
      %723 = vdwg.mxu0
      %724 = vmatpush.bf16.msra.mxu0 0
      %725 = vmatpush.bf16.msra.mxu0 0
      %726 = vmatpush.bf16.msra.mxu0 0
      %727 = vmatpush.bf16.msra.mxu0 0
      %728 = vmatpush.bf16.msra.mxu0 0
      %729 = vmatpush.bf16.msra.mxu0 0
      %730 = vmatpush.bf16.msra.mxu0 %v581
      %731 = vmatpush.bf16.msra.mxu0 %v579
      %732 = vmatmul.bf16.gmra.mxu0 %v588
      %v733 = vpop.f32.mrf.mxu0
      %v734 = vadd.f32 0.0, %v733
      %v735 = vpop.f32.mrf.mxu0
      %v736 = vadd.f32 0.0, %v735
      %737 = vmatmul.bf16.gmra.mxu0 %v591
      %v738 = vpop.f32.mrf.mxu0
      %v739 = vadd.f32 0.0, %v738
      %v740 = vpop.f32.mrf.mxu0
      %v741 = vadd.f32 0.0, %v740
      %742 = vmatmul.bf16.gmra.mxu0 %v594
      %v743 = vpop.f32.mrf.mxu0
      %v744 = vadd.f32 0.0, %v743
      %v745 = vpop.f32.mrf.mxu0
      %v746 = vadd.f32 0.0, %v745
      %747 = vmatmul.bf16.gmra.mxu0 %v597
      %v748 = vpop.f32.mrf.mxu0
      %v749 = vadd.f32 0.0, %v748
      %v750 = vpop.f32.mrf.mxu0
      %v751 = vadd.f32 0.0, %v750
      %752 = vmatmul.bf16.gmra.mxu0 %v600
      %v753 = vpop.f32.mrf.mxu0
      %v754 = vadd.f32 0.0, %v753
      %v755 = vpop.f32.mrf.mxu0
      %v756 = vadd.f32 0.0, %v755
      %757 = vmatmul.bf16.gmra.mxu0 %v603
      %v758 = vpop.f32.mrf.mxu0
      %v759 = vadd.f32 0.0, %v758
      %v760 = vpop.f32.mrf.mxu0
      %v761 = vadd.f32 0.0, %v760
      %762 = vmatmul.bf16.gmra.mxu0 %v606
      %v763 = vpop.f32.mrf.mxu0
      %v764 = vadd.f32 0.0, %v763
      %v765 = vpop.f32.mrf.mxu0
      %v766 = vadd.f32 0.0, %v765
      %767 = vmatmul.bf16.gmra.mxu0 %v609
      %v768 = vpop.f32.mrf.mxu0
      %v769 = vadd.f32 0.0, %v768
      %v770 = vpop.f32.mrf.mxu0
      %v771 = vadd.f32 0.0, %v770
      %772 = vmatmul.bf16.gmra.mxu0 %v612
      %v773 = vpop.f32.mrf.mxu0
      %v774 = vadd.f32 0.0, %v773
      %v775 = vpop.f32.mrf.mxu0
      %v776 = vadd.f32 0.0, %v775
      %777 = vmatmul.bf16.gmra.mxu0 %v615
      %v778 = vpop.f32.mrf.mxu0
      %v779 = vadd.f32 0.0, %v778
      %v780 = vpop.f32.mrf.mxu0
      %v781 = vadd.f32 0.0, %v780
      %782 = vmatmul.bf16.gmra.mxu0 %v618
      %v783 = vpop.f32.mrf.mxu0
      %v784 = vadd.f32 0.0, %v783
      %v785 = vpop.f32.mrf.mxu0
      %v786 = vadd.f32 0.0, %v785
      %787 = vmatmul.bf16.gmra.mxu0 %v621
      %v788 = vpop.f32.mrf.mxu0
      %v789 = vadd.f32 0.0, %v788
      %v790 = vpop.f32.mrf.mxu0
      %v791 = vadd.f32 0.0, %v790
      %792 = vmatmul.bf16.gmra.mxu0 %v624
      %v793 = vpop.f32.mrf.mxu0
      %v794 = vadd.f32 0.0, %v793
      %v795 = vpop.f32.mrf.mxu0
      %v796 = vadd.f32 0.0, %v795
      %797 = vmatmul.bf16.gmra.mxu0 %v627
      %v798 = vpop.f32.mrf.mxu0
      %v799 = vadd.f32 0.0, %v798
      %v800 = vpop.f32.mrf.mxu0
      %v801 = vadd.f32 0.0, %v800
      %802 = vmatmul.bf16.gmra.mxu0 %v630
      %v803 = vpop.f32.mrf.mxu0
      %v804 = vadd.f32 0.0, %v803
      %v805 = vpop.f32.mrf.mxu0
      %v806 = vadd.f32 0.0, %v805
      %807 = vmatmul.bf16.gmra.mxu0 %v633
      %v808 = vpop.f32.mrf.mxu0
      %v809 = vadd.f32 0.0, %v808
      %v810 = vpop.f32.mrf.mxu0
      %v811 = vadd.f32 0.0, %v810
      %812 = vdwg.mxu0
      %v813 = vld [vmem:[%s400] sm:$0xff]
      %v814 = vld [vmem:[%s400 + $0x8] sm:$0xff]
      %v815 = vld [vmem:[%s400 + $0x10] sm:$0xff]
      %v816 = vld [vmem:[%s400 + $0x18] sm:$0xff]
      %v817 = vld [vmem:[%s400 + $0x20] sm:$0xff]
      %v818 = vld [vmem:[%s400 + $0x28] sm:$0xff]
      %v819 = vld [vmem:[%s400 + $0x30] sm:$0xff]
      %v820 = vld [vmem:[%s400 + $0x38] sm:$0xff]
      %v821 = vld [vmem:[%s400 + $0x40] sm:$0xff]
      %v822 = vld [vmem:[%s400 + $0x48] sm:$0xff]
      %v823 = vld [vmem:[%s400 + $0x50] sm:$0xff]
      %v824 = vld [vmem:[%s400 + $0x58] sm:$0xff]
      %v825 = vld [vmem:[%s400 + $0x60] sm:$0xff]
      %v826 = vld [vmem:[%s400 + $0x68] sm:$0xff]
      %v827 = vld [vmem:[%s400 + $0x70] sm:$0xff]
      %v828 = vld [vmem:[%s400 + $0x78] sm:$0xff]
      %v829 = vld [vmem:[%s400 + $0x80] sm:$0xff]
      %v830 = vld [vmem:[%s400 + $0x88] sm:$0xff]
      %v831 = vld [vmem:[%s400 + $0x90] sm:$0xff]
      %v832 = vld [vmem:[%s400 + $0x98] sm:$0xff]
      %v833 = vld [vmem:[%s400 + $0xa0] sm:$0xff]
      %v834 = vld [vmem:[%s400 + $0xa8] sm:$0xff]
      %v835 = vld [vmem:[%s400 + $0xb0] sm:$0xff]
      %v836 = vld [vmem:[%s400 + $0xb8] sm:$0xff]
      %v837 = vld [vmem:[%s400 + $0xc0] sm:$0xff]
      %v838 = vld [vmem:[%s400 + $0xc8] sm:$0xff]
      %v839 = vld [vmem:[%s400 + $0xd0] sm:$0xff]
      %v840 = vld [vmem:[%s400 + $0xd8] sm:$0xff]
      %v841 = vld [vmem:[%s400 + $0xe0] sm:$0xff]
      %v842 = vld [vmem:[%s400 + $0xe8] sm:$0xff]
      %v843 = vld [vmem:[%s400 + $0xf0] sm:$0xff]
      %v844 = vld [vmem:[%s400 + $0xf8] sm:$0xff]
      %v845 = vld [vmem:[%s390] sm:$0x3]
      %847 = vset.pattern.permute.xlu0 0
      %848 = vperm.xlu0 %847, %v813
      %v849 = vpop.permute.xlu0 %848
      %852 = vset.pattern.permute.xlu0 0
      %853 = vperm.xlu0 %852, %v814
      %v854 = vpop.permute.xlu0 %853
      %857 = vset.pattern.permute.xlu0 0
      %858 = vperm.xlu0 %857, %v815
      %v859 = vpop.permute.xlu0 %858
      %862 = vset.pattern.permute.xlu0 0
      %863 = vperm.xlu0 %862, %v816
      %v864 = vpop.permute.xlu0 %863
      %867 = vset.pattern.permute.xlu0 0
      %868 = vperm.xlu0 %867, %v817
      %v869 = vpop.permute.xlu0 %868
      %872 = vset.pattern.permute.xlu0 0
      %873 = vperm.xlu0 %872, %v818
      %v874 = vpop.permute.xlu0 %873
      %877 = vset.pattern.permute.xlu0 0
      %878 = vperm.xlu0 %877, %v819
      %v879 = vpop.permute.xlu0 %878
      %882 = vset.pattern.permute.xlu0 0
      %883 = vperm.xlu0 %882, %v820
      %v884 = vpop.permute.xlu0 %883
      %887 = vset.pattern.permute.xlu0 0
      %888 = vperm.xlu0 %887, %v821
      %v889 = vpop.permute.xlu0 %888
      %892 = vset.pattern.permute.xlu0 0
      %893 = vperm.xlu0 %892, %v822
      %v894 = vpop.permute.xlu0 %893
      %897 = vset.pattern.permute.xlu0 0
      %898 = vperm.xlu0 %897, %v823
      %v899 = vpop.permute.xlu0 %898
      %902 = vset.pattern.permute.xlu0 0
      %903 = vperm.xlu0 %902, %v824
      %v904 = vpop.permute.xlu0 %903
      %907 = vset.pattern.permute.xlu0 0
      %908 = vperm.xlu0 %907, %v825
      %v909 = vpop.permute.xlu0 %908
      %912 = vset.pattern.permute.xlu0 0
      %913 = vperm.xlu0 %912, %v826
      %v914 = vpop.permute.xlu0 %913
      %917 = vset.pattern.permute.xlu0 0
      %918 = vperm.xlu0 %917, %v827
      %v919 = vpop.permute.xlu0 %918
      %922 = vset.pattern.permute.xlu0 0
      %923 = vperm.xlu0 %922, %v828
      %v924 = vpop.permute.xlu0 %923
      %927 = vset.pattern.permute.xlu0 0
      %928 = vperm.xlu0 %927, %v829
      %v929 = vpop.permute.xlu0 %928
      %932 = vset.pattern.permute.xlu0 0
      %933 = vperm.xlu0 %932, %v830
      %v934 = vpop.permute.xlu0 %933
      %937 = vset.pattern.permute.xlu0 0
      %938 = vperm.xlu0 %937, %v831
      %v939 = vpop.permute.xlu0 %938
      %942 = vset.pattern.permute.xlu0 0
      %943 = vperm.xlu0 %942, %v832
      %v944 = vpop.permute.xlu0 %943
      %947 = vset.pattern.permute.xlu0 0
      %948 = vperm.xlu0 %947, %v833
      %v949 = vpop.permute.xlu0 %948
      %952 = vset.pattern.permute.xlu0 0
      %953 = vperm.xlu0 %952, %v834
      %v954 = vpop.permute.xlu0 %953
      %957 = vset.pattern.permute.xlu0 0
      %958 = vperm.xlu0 %957, %v835
      %v959 = vpop.permute.xlu0 %958
      %962 = vset.pattern.permute.xlu0 0
      %963 = vperm.xlu0 %962, %v836
      %v964 = vpop.permute.xlu0 %963
      %967 = vset.pattern.permute.xlu0 0
      %968 = vperm.xlu0 %967, %v837
      %v969 = vpop.permute.xlu0 %968
      %972 = vset.pattern.permute.xlu0 0
      %973 = vperm.xlu0 %972, %v838
      %v974 = vpop.permute.xlu0 %973
      %977 = vset.pattern.permute.xlu0 0
      %978 = vperm.xlu0 %977, %v839
      %v979 = vpop.permute.xlu0 %978
      %982 = vset.pattern.permute.xlu0 0
      %983 = vperm.xlu0 %982, %v840
      %v984 = vpop.permute.xlu0 %983
      %987 = vset.pattern.permute.xlu0 0
      %988 = vperm.xlu0 %987, %v841
      %v989 = vpop.permute.xlu0 %988
      %992 = vset.pattern.permute.xlu0 0
      %993 = vperm.xlu0 %992, %v842
      %v994 = vpop.permute.xlu0 %993
      %997 = vset.pattern.permute.xlu0 0
      %998 = vperm.xlu0 %997, %v843
      %v999 = vpop.permute.xlu0 %998
      %1002 = vset.pattern.permute.xlu0 0
      %1003 = vperm.xlu0 %1002, %v844
      %v1004 = vpop.permute.xlu0 %1003
      %v1007 = vperm.slane %v845, 0
      %v1008 = vperm.slane %v845, 1
      %vm1011 = vcmp.eq.f32.partialorder %v849, %v1007
      %vm1012 = vcmp.eq.f32.partialorder %v849, %v1008
      %vm1013 = vcmp.eq.f32.partialorder %v854, %v1007
      %vm1014 = vcmp.eq.f32.partialorder %v854, %v1008
      %vm1015 = vcmp.eq.f32.partialorder %v859, %v1007
      %vm1016 = vcmp.eq.f32.partialorder %v859, %v1008
      %vm1017 = vcmp.eq.f32.partialorder %v864, %v1007
      %vm1018 = vcmp.eq.f32.partialorder %v864, %v1008
      %vm1019 = vcmp.eq.f32.partialorder %v869, %v1007
      %vm1020 = vcmp.eq.f32.partialorder %v869, %v1008
      %vm1021 = vcmp.eq.f32.partialorder %v874, %v1007
      %vm1022 = vcmp.eq.f32.partialorder %v874, %v1008
      %vm1023 = vcmp.eq.f32.partialorder %v879, %v1007
      %vm1024 = vcmp.eq.f32.partialorder %v879, %v1008
      %vm1025 = vcmp.eq.f32.partialorder %v884, %v1007
      %vm1026 = vcmp.eq.f32.partialorder %v884, %v1008
      %vm1027 = vcmp.eq.f32.partialorder %v889, %v1007
      %vm1028 = vcmp.eq.f32.partialorder %v889, %v1008
      %vm1029 = vcmp.eq.f32.partialorder %v894, %v1007
      %vm1030 = vcmp.eq.f32.partialorder %v894, %v1008
      %vm1031 = vcmp.eq.f32.partialorder %v899, %v1007
      %vm1032 = vcmp.eq.f32.partialorder %v899, %v1008
      %vm1033 = vcmp.eq.f32.partialorder %v904, %v1007
      %vm1034 = vcmp.eq.f32.partialorder %v904, %v1008
      %vm1035 = vcmp.eq.f32.partialorder %v909, %v1007
      %vm1036 = vcmp.eq.f32.partialorder %v909, %v1008
      %vm1037 = vcmp.eq.f32.partialorder %v914, %v1007
      %vm1038 = vcmp.eq.f32.partialorder %v914, %v1008
      %vm1039 = vcmp.eq.f32.partialorder %v919, %v1007
      %vm1040 = vcmp.eq.f32.partialorder %v919, %v1008
      %vm1041 = vcmp.eq.f32.partialorder %v924, %v1007
      %vm1042 = vcmp.eq.f32.partialorder %v924, %v1008
      %vm1043 = vcmp.eq.f32.partialorder %v929, %v1007
      %vm1044 = vcmp.eq.f32.partialorder %v929, %v1008
      %vm1045 = vcmp.eq.f32.partialorder %v934, %v1007
      %vm1046 = vcmp.eq.f32.partialorder %v934, %v1008
      %vm1047 = vcmp.eq.f32.partialorder %v939, %v1007
      %vm1048 = vcmp.eq.f32.partialorder %v939, %v1008
      %vm1049 = vcmp.eq.f32.partialorder %v944, %v1007
      %vm1050 = vcmp.eq.f32.partialorder %v944, %v1008
      %vm1051 = vcmp.eq.f32.partialorder %v949, %v1007
      %vm1052 = vcmp.eq.f32.partialorder %v949, %v1008
      %vm1053 = vcmp.eq.f32.partialorder %v954, %v1007
      %vm1054 = vcmp.eq.f32.partialorder %v954, %v1008
      %vm1055 = vcmp.eq.f32.partialorder %v959, %v1007
      %vm1056 = vcmp.eq.f32.partialorder %v959, %v1008
      %vm1057 = vcmp.eq.f32.partialorder %v964, %v1007
      %vm1058 = vcmp.eq.f32.partialorder %v964, %v1008
      %vm1059 = vcmp.eq.f32.partialorder %v969, %v1007
      %vm1060 = vcmp.eq.f32.partialorder %v969, %v1008
      %vm1061 = vcmp.eq.f32.partialorder %v974, %v1007
      %vm1062 = vcmp.eq.f32.partialorder %v974, %v1008
      %vm1063 = vcmp.eq.f32.partialorder %v979, %v1007
      %vm1064 = vcmp.eq.f32.partialorder %v979, %v1008
      %vm1065 = vcmp.eq.f32.partialorder %v984, %v1007
      %vm1066 = vcmp.eq.f32.partialorder %v984, %v1008
      %vm1067 = vcmp.eq.f32.partialorder %v989, %v1007
      %vm1068 = vcmp.eq.f32.partialorder %v989, %v1008
      %vm1069 = vcmp.eq.f32.partialorder %v994, %v1007
      %vm1070 = vcmp.eq.f32.partialorder %v994, %v1008
      %vm1071 = vcmp.eq.f32.partialorder %v999, %v1007
      %vm1072 = vcmp.eq.f32.partialorder %v999, %v1008
      %vm1073 = vcmp.eq.f32.partialorder %v1004, %v1007
      %vm1074 = vcmp.eq.f32.partialorder %v1004, %v1008
      %v1075 = vsel %vm1011, %v645, -30.0
      %v1076 = vsel %vm1012, %v734, -30.0
      %v1077 = vsel %vm1013, %v647, -30.0
      %v1078 = vsel %vm1014, %v736, -30.0
      %v1079 = vsel %vm1015, %v650, -30.0
      %v1080 = vsel %vm1016, %v739, -30.0
      %v1081 = vsel %vm1017, %v652, -30.0
      %v1082 = vsel %vm1018, %v741, -30.0
      %v1083 = vsel %vm1019, %v655, -30.0
      %v1084 = vsel %vm1020, %v744, -30.0
      %v1085 = vsel %vm1021, %v657, -30.0
      %v1086 = vsel %vm1022, %v746, -30.0
      %v1087 = vsel %vm1023, %v660, -30.0
      %v1088 = vsel %vm1024, %v749, -30.0
      %v1089 = vsel %vm1025, %v662, -30.0
      %v1090 = vsel %vm1026, %v751, -30.0
      %v1091 = vsel %vm1027, %v665, -30.0
      %v1092 = vsel %vm1028, %v754, -30.0
      %v1093 = vsel %vm1029, %v667, -30.0
      %v1094 = vsel %vm1030, %v756, -30.0
      %v1095 = vsel %vm1031, %v670, -30.0
      %v1096 = vsel %vm1032, %v759, -30.0
      %v1097 = vsel %vm1033, %v672, -30.0
      %v1098 = vsel %vm1034, %v761, -30.0
      %v1099 = vsel %vm1035, %v675, -30.0
      %v1100 = vsel %vm1036, %v764, -30.0
      %v1101 = vsel %vm1037, %v677, -30.0
      %v1102 = vsel %vm1038, %v766, -30.0
      %v1103 = vsel %vm1039, %v680, -30.0
      %v1104 = vsel %vm1040, %v769, -30.0
      %v1105 = vsel %vm1041, %v682, -30.0
      %v1106 = vsel %vm1042, %v771, -30.0
      %v1107 = vsel %vm1043, %v685, -30.0
      %v1108 = vsel %vm1044, %v774, -30.0
      %v1109 = vsel %vm1045, %v687, -30.0
      %v1110 = vsel %vm1046, %v776, -30.0
      %v1111 = vsel %vm1047, %v690, -30.0
      %v1112 = vsel %vm1048, %v779, -30.0
      %v1113 = vsel %vm1049, %v692, -30.0
      %v1114 = vsel %vm1050, %v781, -30.0
      %v1115 = vsel %vm1051, %v695, -30.0
      %v1116 = vsel %vm1052, %v784, -30.0
      %v1117 = vsel %vm1053, %v697, -30.0
      %v1118 = vsel %vm1054, %v786, -30.0
      %v1119 = vsel %vm1055, %v700, -30.0
      %v1120 = vsel %vm1056, %v789, -30.0
      %v1121 = vsel %vm1057, %v702, -30.0
      %v1122 = vsel %vm1058, %v791, -30.0
      %v1123 = vsel %vm1059, %v705, -30.0
      %v1124 = vsel %vm1060, %v794, -30.0
      %v1125 = vsel %vm1061, %v707, -30.0
      %v1126 = vsel %vm1062, %v796, -30.0
      %v1127 = vsel %vm1063, %v710, -30.0
      %v1128 = vsel %vm1064, %v799, -30.0
      %v1129 = vsel %vm1065, %v712, -30.0
      %v1130 = vsel %vm1066, %v801, -30.0
      %v1131 = vsel %vm1067, %v715, -30.0
      %v1132 = vsel %vm1068, %v804, -30.0
      %v1133 = vsel %vm1069, %v717, -30.0
      %v1134 = vsel %vm1070, %v806, -30.0
      %v1135 = vsel %vm1071, %v720, -30.0
      %v1136 = vsel %vm1072, %v809, -30.0
      %v1137 = vsel %vm1073, %v722, -30.0
      %v1138 = vsel %vm1074, %v811, -30.0
      %v1139 = vmul.f32 %v1075, 1.442695
      %v1140 = vpow.pop %v1139
      %v1141 = vmul.f32 %v1076, 1.442695
      %v1142 = vpow.pop %v1141
      %v1143 = vmul.f32 %v1077, 1.442695
      %v1144 = vpow.pop %v1143
      %v1145 = vmul.f32 %v1078, 1.442695
      %v1146 = vpow.pop %v1145
      %v1147 = vmul.f32 %v1079, 1.442695
      %v1148 = vpow.pop %v1147
      %v1149 = vmul.f32 %v1080, 1.442695
      %v1150 = vpow.pop %v1149
      %v1151 = vmul.f32 %v1081, 1.442695
      %v1152 = vpow.pop %v1151
      %v1153 = vmul.f32 %v1082, 1.442695
      %v1154 = vpow.pop %v1153
      %v1155 = vmul.f32 %v1083, 1.442695
      %v1156 = vpow.pop %v1155
      %v1157 = vmul.f32 %v1084, 1.442695
      %v1158 = vpow.pop %v1157
      %v1159 = vmul.f32 %v1085, 1.442695
      %v1160 = vpow.pop %v1159
      %v1161 = vmul.f32 %v1086, 1.442695
      %v1162 = vpow.pop %v1161
      %v1163 = vmul.f32 %v1087, 1.442695
      %v1164 = vpow.pop %v1163
      %v1165 = vmul.f32 %v1088, 1.442695
      %v1166 = vpow.pop %v1165
      %v1167 = vmul.f32 %v1089, 1.442695
      %v1168 = vpow.pop %v1167
      %v1169 = vmul.f32 %v1090, 1.442695
      %v1170 = vpow.pop %v1169
      %v1171 = vmul.f32 %v1091, 1.442695
      %v1172 = vpow.pop %v1171
      %v1173 = vmul.f32 %v1092, 1.442695
      %v1174 = vpow.pop %v1173
      %v1175 = vmul.f32 %v1093, 1.442695
      %v1176 = vpow.pop %v1175
      %v1177 = vmul.f32 %v1094, 1.442695
      %v1178 = vpow.pop %v1177
      %v1179 = vmul.f32 %v1095, 1.442695
      %v1180 = vpow.pop %v1179
      %v1181 = vmul.f32 %v1096, 1.442695
      %v1182 = vpow.pop %v1181
      %v1183 = vmul.f32 %v1097, 1.442695
      %v1184 = vpow.pop %v1183
      %v1185 = vmul.f32 %v1098, 1.442695
      %v1186 = vpow.pop %v1185
      %v1187 = vmul.f32 %v1099, 1.442695
      %v1188 = vpow.pop %v1187
      %v1189 = vmul.f32 %v1100, 1.442695
      %v1190 = vpow.pop %v1189
      %v1191 = vmul.f32 %v1101, 1.442695
      %v1192 = vpow.pop %v1191
      %v1193 = vmul.f32 %v1102, 1.442695
      %v1194 = vpow.pop %v1193
      %v1195 = vmul.f32 %v1103, 1.442695
      %v1196 = vpow.pop %v1195
      %v1197 = vmul.f32 %v1104, 1.442695
      %v1198 = vpow.pop %v1197
      %v1199 = vmul.f32 %v1105, 1.442695
      %v1200 = vpow.pop %v1199
      %v1201 = vmul.f32 %v1106, 1.442695
      %v1202 = vpow.pop %v1201
      %v1203 = vmul.f32 %v1107, 1.442695
      %v1204 = vpow.pop %v1203
      %v1205 = vmul.f32 %v1108, 1.442695
      %v1206 = vpow.pop %v1205
      %v1207 = vmul.f32 %v1109, 1.442695
      %v1208 = vpow.pop %v1207
      %v1209 = vmul.f32 %v1110, 1.442695
      %v1210 = vpow.pop %v1209
      %v1211 = vmul.f32 %v1111, 1.442695
      %v1212 = vpow.pop %v1211
      %v1213 = vmul.f32 %v1112, 1.442695
      %v1214 = vpow.pop %v1213
      %v1215 = vmul.f32 %v1113, 1.442695
      %v1216 = vpow.pop %v1215
      %v1217 = vmul.f32 %v1114, 1.442695
      %v1218 = vpow.pop %v1217
      %v1219 = vmul.f32 %v1115, 1.442695
      %v1220 = vpow.pop %v1219
      %v1221 = vmul.f32 %v1116, 1.442695
      %v1222 = vpow.pop %v1221
      %v1223 = vmul.f32 %v1117, 1.442695
      %v1224 = vpow.pop %v1223
      %v1225 = vmul.f32 %v1118, 1.442695
      %v1226 = vpow.pop %v1225
      %v1227 = vmul.f32 %v1119, 1.442695
      %v1228 = vpow.pop %v1227
      %v1229 = vmul.f32 %v1120, 1.442695
      %v1230 = vpow.pop %v1229
      %v1231 = vmul.f32 %v1121, 1.442695
      %v1232 = vpow.pop %v1231
      %v1233 = vmul.f32 %v1122, 1.442695
      %v1234 = vpow.pop %v1233
      %v1235 = vmul.f32 %v1123, 1.442695
      %v1236 = vpow.pop %v1235
      %v1237 = vmul.f32 %v1124, 1.442695
      %v1238 = vpow.pop %v1237
      %v1239 = vmul.f32 %v1125, 1.442695
      %v1240 = vpow.pop %v1239
      %v1241 = vmul.f32 %v1126, 1.442695
      %v1242 = vpow.pop %v1241
      %v1243 = vmul.f32 %v1127, 1.442695
      %v1244 = vpow.pop %v1243
      %v1245 = vmul.f32 %v1128, 1.442695
      %v1246 = vpow.pop %v1245
      %v1247 = vmul.f32 %v1129, 1.442695
      %v1248 = vpow.pop %v1247
      %v1249 = vmul.f32 %v1130, 1.442695
      %v1250 = vpow.pop %v1249
      %v1251 = vmul.f32 %v1131, 1.442695
      %v1252 = vpow.pop %v1251
      %v1253 = vmul.f32 %v1132, 1.442695
      %v1254 = vpow.pop %v1253
      %v1255 = vmul.f32 %v1133, 1.442695
      %v1256 = vpow.pop %v1255
      %v1257 = vmul.f32 %v1134, 1.442695
      %v1258 = vpow.pop %v1257
      %v1259 = vmul.f32 %v1135, 1.442695
      %v1260 = vpow.pop %v1259
      %v1261 = vmul.f32 %v1136, 1.442695
      %v1262 = vpow.pop %v1261
      %v1263 = vmul.f32 %v1137, 1.442695
      %v1264 = vpow.pop %v1263
      %v1265 = vmul.f32 %v1138, 1.442695
      %v1266 = vpow.pop %v1265
      %v1267 = vpack.c.bf16 %v1144, %v1140
      %v1268 = vpack.c.bf16 %v1146, %v1142
      %v1269 = vpack.c.bf16 %v1152, %v1148
      %v1270 = vpack.c.bf16 %v1154, %v1150
      %v1271 = vpack.c.bf16 %v1160, %v1156
      %v1272 = vpack.c.bf16 %v1162, %v1158
      %v1273 = vpack.c.bf16 %v1168, %v1164
      %v1274 = vpack.c.bf16 %v1170, %v1166
      %v1275 = vpack.c.bf16 %v1176, %v1172
      %v1276 = vpack.c.bf16 %v1178, %v1174
      %v1277 = vpack.c.bf16 %v1184, %v1180
      %v1278 = vpack.c.bf16 %v1186, %v1182
      %v1279 = vpack.c.bf16 %v1192, %v1188
      %v1280 = vpack.c.bf16 %v1194, %v1190
      %v1281 = vpack.c.bf16 %v1200, %v1196
      %v1282 = vpack.c.bf16 %v1202, %v1198
      %v1283 = vpack.c.bf16 %v1208, %v1204
      %v1284 = vpack.c.bf16 %v1210, %v1206
      %v1285 = vpack.c.bf16 %v1216, %v1212
      %v1286 = vpack.c.bf16 %v1218, %v1214
      %v1287 = vpack.c.bf16 %v1224, %v1220
      %v1288 = vpack.c.bf16 %v1226, %v1222
      %v1289 = vpack.c.bf16 %v1232, %v1228
      %v1290 = vpack.c.bf16 %v1234, %v1230
      %v1291 = vpack.c.bf16 %v1240, %v1236
      %v1292 = vpack.c.bf16 %v1242, %v1238
      %v1293 = vpack.c.bf16 %v1248, %v1244
      %v1294 = vpack.c.bf16 %v1250, %v1246
      %v1295 = vpack.c.bf16 %v1256, %v1252
      %v1296 = vpack.c.bf16 %v1258, %v1254
      %v1297 = vpack.c.bf16 %v1264, %v1260
      %v1298 = vpack.c.bf16 %v1266, %v1262
      %v1299 = vld [vmem:[#allocation2] sm:$0xff]
      %v1300 = vld [vmem:[#allocation2 + $0x8] sm:$0xff]
      %v1301 = vld [vmem:[#allocation2 + $0x10] sm:$0xff]
      %v1302 = vld [vmem:[#allocation2 + $0x18] sm:$0xff]
      %v1303 = vld [vmem:[#allocation2 + $0x20] sm:$0xff]
      %v1304 = vld [vmem:[#allocation2 + $0x28] sm:$0xff]
      %v1305 = vld [vmem:[#allocation2 + $0x30] sm:$0xff]
      %v1306 = vld [vmem:[#allocation2 + $0x38] sm:$0xff]
      %v1307 = vld [vmem:[#allocation2 + $0x40] sm:$0xff]
      %v1308 = vld [vmem:[#allocation2 + $0x48] sm:$0xff]
      %v1309 = vld [vmem:[#allocation2 + $0x50] sm:$0xff]
      %v1310 = vld [vmem:[#allocation2 + $0x58] sm:$0xff]
      %v1311 = vld [vmem:[#allocation2 + $0x60] sm:$0xff]
      %v1312 = vld [vmem:[#allocation2 + $0x68] sm:$0xff]
      %v1313 = vld [vmem:[#allocation2 + $0x70] sm:$0xff]
      %v1314 = vld [vmem:[#allocation2 + $0x78] sm:$0xff]
      %v1315 = vld [vmem:[#allocation2 + $0x80] sm:$0xff]
      %v1316 = vld [vmem:[#allocation2 + $0x88] sm:$0xff]
      %v1317 = vld [vmem:[#allocation2 + $0x90] sm:$0xff]
      %v1318 = vld [vmem:[#allocation2 + $0x98] sm:$0xff]
      %v1319 = vld [vmem:[#allocation2 + $0xa0] sm:$0xff]
      %v1320 = vld [vmem:[#allocation2 + $0xa8] sm:$0xff]
      %v1321 = vld [vmem:[#allocation2 + $0xb0] sm:$0xff]
      %v1322 = vld [vmem:[#allocation2 + $0xb8] sm:$0xff]
      %v1323 = vld [vmem:[#allocation2 + $0xc0] sm:$0xff]
      %v1324 = vld [vmem:[#allocation2 + $0xc8] sm:$0xff]
      %v1325 = vld [vmem:[#allocation2 + $0xd0] sm:$0xff]
      %v1326 = vld [vmem:[#allocation2 + $0xd8] sm:$0xff]
      %v1327 = vld [vmem:[#allocation2 + $0xe0] sm:$0xff]
      %v1328 = vld [vmem:[#allocation2 + $0xe8] sm:$0xff]
      %v1329 = vld [vmem:[#allocation2 + $0xf0] sm:$0xff]
      %v1330 = vld [vmem:[#allocation2 + $0xf8] sm:$0xff]
      %v1331 = vld [vmem:[%s381] sm:$0xf]
      %v1332 = vld [vmem:[%s381 + $0x4] sm:$0xf]
      %v1333 = vld [vmem:[%s381 + $0x8] sm:$0xf]
      %v1334 = vld [vmem:[%s381 + $0xc] sm:$0xf]
      %v1335 = vld [vmem:[%s381 + $0x10] sm:$0xf]
      %v1336 = vld [vmem:[%s381 + $0x14] sm:$0xf]
      %v1337 = vld [vmem:[%s381 + $0x18] sm:$0xf]
      %v1338 = vld [vmem:[%s381 + $0x1c] sm:$0xf]
      %v1339 = vld [vmem:[%s381 + $0x20] sm:$0xf]
      %v1340 = vld [vmem:[%s381 + $0x24] sm:$0xf]
      %v1341 = vld [vmem:[%s381 + $0x28] sm:$0xf]
      %v1342 = vld [vmem:[%s381 + $0x2c] sm:$0xf]
      %v1343 = vld [vmem:[%s381 + $0x30] sm:$0xf]
      %v1344 = vld [vmem:[%s381 + $0x34] sm:$0xf]
      %v1345 = vld [vmem:[%s381 + $0x38] sm:$0xf]
      %v1346 = vld [vmem:[%s381 + $0x3c] sm:$0xf]
      %v1347 = vld [vmem:[%s381 + $0x40] sm:$0xf]
      %v1348 = vld [vmem:[%s381 + $0x44] sm:$0xf]
      %v1349 = vld [vmem:[%s381 + $0x48] sm:$0xf]
      %v1350 = vld [vmem:[%s381 + $0x4c] sm:$0xf]
      %v1351 = vld [vmem:[%s381 + $0x50] sm:$0xf]
      %v1352 = vld [vmem:[%s381 + $0x54] sm:$0xf]
      %v1353 = vld [vmem:[%s381 + $0x58] sm:$0xf]
      %v1354 = vld [vmem:[%s381 + $0x5c] sm:$0xf]
      %v1355 = vld [vmem:[%s381 + $0x60] sm:$0xf]
      %v1356 = vld [vmem:[%s381 + $0x64] sm:$0xf]
      %v1357 = vld [vmem:[%s381 + $0x68] sm:$0xf]
      %v1358 = vld [vmem:[%s381 + $0x6c] sm:$0xf]
      %v1359 = vld [vmem:[%s381 + $0x70] sm:$0xf]
      %v1360 = vld [vmem:[%s381 + $0x74] sm:$0xf]
      %v1361 = vld [vmem:[%s381 + $0x78] sm:$0xf]
      %v1362 = vld [vmem:[%s381 + $0x7c] sm:$0xf]
      %v1395 = vunpack.c.l.b16 %v1331
      %v1396 = vunpack.c.l.b16 %v1332
      %v1397 = vunpack.c.l.b16 %v1333
      %v1398 = vunpack.c.l.b16 %v1334
      %v1399 = vunpack.c.l.b16 %v1335
      %v1400 = vunpack.c.l.b16 %v1336
      %v1401 = vunpack.c.l.b16 %v1337
      %v1402 = vunpack.c.l.b16 %v1338
      %v1403 = vunpack.c.l.b16 %v1339
      %v1404 = vunpack.c.l.b16 %v1340
      %v1405 = vunpack.c.l.b16 %v1341
      %v1406 = vunpack.c.l.b16 %v1342
      %v1407 = vunpack.c.l.b16 %v1343
      %v1408 = vunpack.c.l.b16 %v1344
      %v1409 = vunpack.c.l.b16 %v1345
      %v1410 = vunpack.c.l.b16 %v1346
      %v1411 = vunpack.c.l.b16 %v1347
      %v1412 = vunpack.c.l.b16 %v1348
      %v1413 = vunpack.c.l.b16 %v1349
      %v1414 = vunpack.c.l.b16 %v1350
      %v1415 = vunpack.c.l.b16 %v1351
      %v1416 = vunpack.c.l.b16 %v1352
      %v1417 = vunpack.c.l.b16 %v1353
      %v1418 = vunpack.c.l.b16 %v1354
      %v1419 = vunpack.c.l.b16 %v1355
      %v1420 = vunpack.c.l.b16 %v1356
      %v1421 = vunpack.c.l.b16 %v1357
      %v1422 = vunpack.c.l.b16 %v1358
      %v1423 = vunpack.c.l.b16 %v1359
      %v1424 = vunpack.c.l.b16 %v1360
      %v1425 = vunpack.c.l.b16 %v1361
      %v1426 = vunpack.c.l.b16 %v1362
      %v1427 = vpack.c.b16 %v1396, %v1395
      %v1428 = vpack.c.b16 %v1398, %v1397
      %v1429 = vpack.c.b16 %v1400, %v1399
      %v1430 = vpack.c.b16 %v1402, %v1401
      %v1431 = vpack.c.b16 %v1404, %v1403
      %v1432 = vpack.c.b16 %v1406, %v1405
      %v1433 = vpack.c.b16 %v1408, %v1407
      %v1434 = vpack.c.b16 %v1410, %v1409
      %v1435 = vpack.c.b16 %v1412, %v1411
      %v1436 = vpack.c.b16 %v1414, %v1413
      %v1437 = vpack.c.b16 %v1416, %v1415
      %v1438 = vpack.c.b16 %v1418, %v1417
      %v1439 = vpack.c.b16 %v1420, %v1419
      %v1440 = vpack.c.b16 %v1422, %v1421
      %v1441 = vpack.c.b16 %v1424, %v1423
      %v1442 = vpack.c.b16 %v1426, %v1425
      %1459 = vmatpush.bf16.msra.mxu0 %v1434
      %1460 = vmatpush.bf16.msra.mxu0 %v1433
      %1461 = vmatpush.bf16.msra.mxu0 %v1432
      %1462 = vmatpush.bf16.msra.mxu0 %v1431
      %1463 = vmatpush.bf16.msra.mxu0 %v1430
      %1464 = vmatpush.bf16.msra.mxu0 %v1429
      %1465 = vmatpush.bf16.msra.mxu0 %v1428
      %1466 = vmatpush.bf16.msra.mxu0 %v1427
      %1467 = vmatmul.bf16.gmra.mxu0 %v1267
      %v1468 = vpop.f32.mrf.mxu0
      %v1469 = vadd.f32 0.0, %v1468
      %v1470 = vpop.f32.mrf.mxu0
      %v1471 = vadd.f32 0.0, %v1470
      %1472 = vmatmul.bf16.gmra.mxu0 %v1269
      %v1473 = vpop.f32.mrf.mxu0
      %v1474 = vadd.f32 0.0, %v1473
      %v1475 = vpop.f32.mrf.mxu0
      %v1476 = vadd.f32 0.0, %v1475
      %1477 = vmatmul.bf16.gmra.mxu0 %v1271
      %v1478 = vpop.f32.mrf.mxu0
      %v1479 = vadd.f32 0.0, %v1478
      %v1480 = vpop.f32.mrf.mxu0
      %v1481 = vadd.f32 0.0, %v1480
      %1482 = vmatmul.bf16.gmra.mxu0 %v1273
      %v1483 = vpop.f32.mrf.mxu0
      %v1484 = vadd.f32 0.0, %v1483
      %v1485 = vpop.f32.mrf.mxu0
      %v1486 = vadd.f32 0.0, %v1485
      %1487 = vmatmul.bf16.gmra.mxu0 %v1275
      %v1488 = vpop.f32.mrf.mxu0
      %v1489 = vadd.f32 0.0, %v1488
      %v1490 = vpop.f32.mrf.mxu0
      %v1491 = vadd.f32 0.0, %v1490
      %1492 = vmatmul.bf16.gmra.mxu0 %v1277
      %v1493 = vpop.f32.mrf.mxu0
      %v1494 = vadd.f32 0.0, %v1493
      %v1495 = vpop.f32.mrf.mxu0
      %v1496 = vadd.f32 0.0, %v1495
      %1497 = vmatmul.bf16.gmra.mxu0 %v1279
      %v1498 = vpop.f32.mrf.mxu0
      %v1499 = vadd.f32 0.0, %v1498
      %v1500 = vpop.f32.mrf.mxu0
      %v1501 = vadd.f32 0.0, %v1500
      %1502 = vmatmul.bf16.gmra.mxu0 %v1281
      %v1503 = vpop.f32.mrf.mxu0
      %v1504 = vadd.f32 0.0, %v1503
      %v1505 = vpop.f32.mrf.mxu0
      %v1506 = vadd.f32 0.0, %v1505
      %1507 = vmatmul.bf16.gmra.mxu0 %v1283
      %v1508 = vpop.f32.mrf.mxu0
      %v1509 = vadd.f32 0.0, %v1508
      %v1510 = vpop.f32.mrf.mxu0
      %v1511 = vadd.f32 0.0, %v1510
      %1512 = vmatmul.bf16.gmra.mxu0 %v1285
      %v1513 = vpop.f32.mrf.mxu0
      %v1514 = vadd.f32 0.0, %v1513
      %v1515 = vpop.f32.mrf.mxu0
      %v1516 = vadd.f32 0.0, %v1515
      %1517 = vmatmul.bf16.gmra.mxu0 %v1287
      %v1518 = vpop.f32.mrf.mxu0
      %v1519 = vadd.f32 0.0, %v1518
      %v1520 = vpop.f32.mrf.mxu0
      %v1521 = vadd.f32 0.0, %v1520
      %1522 = vmatmul.bf16.gmra.mxu0 %v1289
      %v1523 = vpop.f32.mrf.mxu0
      %v1524 = vadd.f32 0.0, %v1523
      %v1525 = vpop.f32.mrf.mxu0
      %v1526 = vadd.f32 0.0, %v1525
      %1527 = vmatmul.bf16.gmra.mxu0 %v1291
      %v1528 = vpop.f32.mrf.mxu0
      %v1529 = vadd.f32 0.0, %v1528
      %v1530 = vpop.f32.mrf.mxu0
      %v1531 = vadd.f32 0.0, %v1530
      %1532 = vmatmul.bf16.gmra.mxu0 %v1293
      %v1533 = vpop.f32.mrf.mxu0
      %v1534 = vadd.f32 0.0, %v1533
      %v1535 = vpop.f32.mrf.mxu0
      %v1536 = vadd.f32 0.0, %v1535
      %1537 = vmatmul.bf16.gmra.mxu0 %v1295
      %v1538 = vpop.f32.mrf.mxu0
      %v1539 = vadd.f32 0.0, %v1538
      %v1540 = vpop.f32.mrf.mxu0
      %v1541 = vadd.f32 0.0, %v1540
      %1542 = vmatmul.bf16.gmra.mxu0 %v1297
      %v1543 = vpop.f32.mrf.mxu0
      %v1544 = vadd.f32 0.0, %v1543
      %v1545 = vpop.f32.mrf.mxu0
      %v1546 = vadd.f32 0.0, %v1545
      %1547 = vdwg.mxu0
      %1548 = vmatpush.bf16.msra.mxu0 %v1442
      %1549 = vmatpush.bf16.msra.mxu0 %v1441
      %1550 = vmatpush.bf16.msra.mxu0 %v1440
      %1551 = vmatpush.bf16.msra.mxu0 %v1439
      %1552 = vmatpush.bf16.msra.mxu0 %v1438
      %1553 = vmatpush.bf16.msra.mxu0 %v1437
      %1554 = vmatpush.bf16.msra.mxu0 %v1436
      %1555 = vmatpush.bf16.msra.mxu0 %v1435
      %1556 = vmatmul.bf16.gmra.mxu0 %v1268
      %v1557 = vpop.f32.mrf.mxu0
      %v1558 = vadd.f32 %v1469, %v1557
      %v1559 = vpop.f32.mrf.mxu0
      %v1560 = vadd.f32 %v1471, %v1559
      %1561 = vmatmul.bf16.gmra.mxu0 %v1270
      %v1562 = vpop.f32.mrf.mxu0
      %v1563 = vadd.f32 %v1474, %v1562
      %v1564 = vpop.f32.mrf.mxu0
      %v1565 = vadd.f32 %v1476, %v1564
      %1566 = vmatmul.bf16.gmra.mxu0 %v1272
      %v1567 = vpop.f32.mrf.mxu0
      %v1568 = vadd.f32 %v1479, %v1567
      %v1569 = vpop.f32.mrf.mxu0
      %v1570 = vadd.f32 %v1481, %v1569
      %1571 = vmatmul.bf16.gmra.mxu0 %v1274
      %v1572 = vpop.f32.mrf.mxu0
      %v1573 = vadd.f32 %v1484, %v1572
      %v1574 = vpop.f32.mrf.mxu0
      %v1575 = vadd.f32 %v1486, %v1574
      %1576 = vmatmul.bf16.gmra.mxu0 %v1276
      %v1577 = vpop.f32.mrf.mxu0
      %v1578 = vadd.f32 %v1489, %v1577
      %v1579 = vpop.f32.mrf.mxu0
      %v1580 = vadd.f32 %v1491, %v1579
      %1581 = vmatmul.bf16.gmra.mxu0 %v1278
      %v1582 = vpop.f32.mrf.mxu0
      %v1583 = vadd.f32 %v1494, %v1582
      %v1584 = vpop.f32.mrf.mxu0
      %v1585 = vadd.f32 %v1496, %v1584
      %1586 = vmatmul.bf16.gmra.mxu0 %v1280
      %v1587 = vpop.f32.mrf.mxu0
      %v1588 = vadd.f32 %v1499, %v1587
      %v1589 = vpop.f32.mrf.mxu0
      %v1590 = vadd.f32 %v1501, %v1589
      %1591 = vmatmul.bf16.gmra.mxu0 %v1282
      %v1592 = vpop.f32.mrf.mxu0
      %v1593 = vadd.f32 %v1504, %v1592
      %v1594 = vpop.f32.mrf.mxu0
      %v1595 = vadd.f32 %v1506, %v1594
      %1596 = vmatmul.bf16.gmra.mxu0 %v1284
      %v1597 = vpop.f32.mrf.mxu0
      %v1598 = vadd.f32 %v1509, %v1597
      %v1599 = vpop.f32.mrf.mxu0
      %v1600 = vadd.f32 %v1511, %v1599
      %1601 = vmatmul.bf16.gmra.mxu0 %v1286
      %v1602 = vpop.f32.mrf.mxu0
      %v1603 = vadd.f32 %v1514, %v1602
      %v1604 = vpop.f32.mrf.mxu0
      %v1605 = vadd.f32 %v1516, %v1604
      %1606 = vmatmul.bf16.gmra.mxu0 %v1288
      %v1607 = vpop.f32.mrf.mxu0
      %v1608 = vadd.f32 %v1519, %v1607
      %v1609 = vpop.f32.mrf.mxu0
      %v1610 = vadd.f32 %v1521, %v1609
      %1611 = vmatmul.bf16.gmra.mxu0 %v1290
      %v1612 = vpop.f32.mrf.mxu0
      %v1613 = vadd.f32 %v1524, %v1612
      %v1614 = vpop.f32.mrf.mxu0
      %v1615 = vadd.f32 %v1526, %v1614
      %1616 = vmatmul.bf16.gmra.mxu0 %v1292
      %v1617 = vpop.f32.mrf.mxu0
      %v1618 = vadd.f32 %v1529, %v1617
      %v1619 = vpop.f32.mrf.mxu0
      %v1620 = vadd.f32 %v1531, %v1619
      %1621 = vmatmul.bf16.gmra.mxu0 %v1294
      %v1622 = vpop.f32.mrf.mxu0
      %v1623 = vadd.f32 %v1534, %v1622
      %v1624 = vpop.f32.mrf.mxu0
      %v1625 = vadd.f32 %v1536, %v1624
      %1626 = vmatmul.bf16.gmra.mxu0 %v1296
      %v1627 = vpop.f32.mrf.mxu0
      %v1628 = vadd.f32 %v1539, %v1627
      %v1629 = vpop.f32.mrf.mxu0
      %v1630 = vadd.f32 %v1541, %v1629
      %1631 = vmatmul.bf16.gmra.mxu0 %v1298
      %v1632 = vpop.f32.mrf.mxu0
      %v1633 = vadd.f32 %v1544, %v1632
      %v1634 = vpop.f32.mrf.mxu0
      %v1635 = vadd.f32 %v1546, %v1634
      %1636 = vdwg.mxu0
      %v1637 = vadd.f32 %v1299, %v1558
      %v1638 = vadd.f32 %v1300, %v1560
      %v1639 = vadd.f32 %v1301, %v1563
      %v1640 = vadd.f32 %v1302, %v1565
      %v1641 = vadd.f32 %v1303, %v1568
      %v1642 = vadd.f32 %v1304, %v1570
      %v1643 = vadd.f32 %v1305, %v1573
      %v1644 = vadd.f32 %v1306, %v1575
      %v1645 = vadd.f32 %v1307, %v1578
      %v1646 = vadd.f32 %v1308, %v1580
      %v1647 = vadd.f32 %v1309, %v1583
      %v1648 = vadd.f32 %v1310, %v1585
      %v1649 = vadd.f32 %v1311, %v1588
      %v1650 = vadd.f32 %v1312, %v1590
      %v1651 = vadd.f32 %v1313, %v1593
      %v1652 = vadd.f32 %v1314, %v1595
      %v1653 = vadd.f32 %v1315, %v1598
      %v1654 = vadd.f32 %v1316, %v1600
      %v1655 = vadd.f32 %v1317, %v1603
      %v1656 = vadd.f32 %v1318, %v1605
      %v1657 = vadd.f32 %v1319, %v1608
      %v1658 = vadd.f32 %v1320, %v1610
      %v1659 = vadd.f32 %v1321, %v1613
      %v1660 = vadd.f32 %v1322, %v1615
      %v1661 = vadd.f32 %v1323, %v1618
      %v1662 = vadd.f32 %v1324, %v1620
      %v1663 = vadd.f32 %v1325, %v1623
      %v1664 = vadd.f32 %v1326, %v1625
      %v1665 = vadd.f32 %v1327, %v1628
      %v1666 = vadd.f32 %v1328, %v1630
      %v1667 = vadd.f32 %v1329, %v1633
      %v1668 = vadd.f32 %v1330, %v1635
      %vm1669 = vcmask 31744
      %1670 = vst.msk [vmem:[#allocation2] sm:$0xff] %vm1669, %v1637
      %1671 = vst.msk [vmem:[#allocation2 + $0x8] sm:$0xff] %vm1669, %v1638
      %1672 = vst.msk [vmem:[#allocation2 + $0x10] sm:$0xff] %vm1669, %v1639
      %1673 = vst.msk [vmem:[#allocation2 + $0x18] sm:$0xff] %vm1669, %v1640
      %1674 = vst.msk [vmem:[#allocation2 + $0x20] sm:$0xff] %vm1669, %v1641
      %1675 = vst.msk [vmem:[#allocation2 + $0x28] sm:$0xff] %vm1669, %v1642
      %1676 = vst.msk [vmem:[#allocation2 + $0x30] sm:$0xff] %vm1669, %v1643
      %1677 = vst.msk [vmem:[#allocation2 + $0x38] sm:$0xff] %vm1669, %v1644
      %1678 = vst.msk [vmem:[#allocation2 + $0x40] sm:$0xff] %vm1669, %v1645
      %1679 = vst.msk [vmem:[#allocation2 + $0x48] sm:$0xff] %vm1669, %v1646
      %1680 = vst.msk [vmem:[#allocation2 + $0x50] sm:$0xff] %vm1669, %v1647
      %1681 = vst.msk [vmem:[#allocation2 + $0x58] sm:$0xff] %vm1669, %v1648
      %1682 = vst.msk [vmem:[#allocation2 + $0x60] sm:$0xff] %vm1669, %v1649
      %1683 = vst.msk [vmem:[#allocation2 + $0x68] sm:$0xff] %vm1669, %v1650
      %1684 = vst.msk [vmem:[#allocation2 + $0x70] sm:$0xff] %vm1669, %v1651
      %1685 = vst.msk [vmem:[#allocation2 + $0x78] sm:$0xff] %vm1669, %v1652
      %1686 = vst.msk [vmem:[#allocation2 + $0x80] sm:$0xff] %vm1669, %v1653
      %1687 = vst.msk [vmem:[#allocation2 + $0x88] sm:$0xff] %vm1669, %v1654
      %1688 = vst.msk [vmem:[#allocation2 + $0x90] sm:$0xff] %vm1669, %v1655
      %1689 = vst.msk [vmem:[#allocation2 + $0x98] sm:$0xff] %vm1669, %v1656
      %1690 = vst.msk [vmem:[#allocation2 + $0xa0] sm:$0xff] %vm1669, %v1657
      %1691 = vst.msk [vmem:[#allocation2 + $0xa8] sm:$0xff] %vm1669, %v1658
      %1692 = vst.msk [vmem:[#allocation2 + $0xb0] sm:$0xff] %vm1669, %v1659
      %1693 = vst.msk [vmem:[#allocation2 + $0xb8] sm:$0xff] %vm1669, %v1660
      %1694 = vst.msk [vmem:[#allocation2 + $0xc0] sm:$0xff] %vm1669, %v1661
      %1695 = vst.msk [vmem:[#allocation2 + $0xc8] sm:$0xff] %vm1669, %v1662
      %1696 = vst.msk [vmem:[#allocation2 + $0xd0] sm:$0xff] %vm1669, %v1663
      %1697 = vst.msk [vmem:[#allocation2 + $0xd8] sm:$0xff] %vm1669, %v1664
      %1698 = vst.msk [vmem:[#allocation2 + $0xe0] sm:$0xff] %vm1669, %v1665
      %1699 = vst.msk [vmem:[#allocation2 + $0xe8] sm:$0xff] %vm1669, %v1666
      %1700 = vst.msk [vmem:[#allocation2 + $0xf0] sm:$0xff] %vm1669, %v1667
      %1701 = vst.msk [vmem:[#allocation2 + $0xf8] sm:$0xff] %vm1669, %v1668
      // Predicated region
      $region45: #{tpu_custom_call.1} parent=39 // pred_check
        %p1702 = pneg %p413
      $region46: #{tpu_custom_call.1} parent=39 // pred_check_branch
        %1704 = sbr.rel (%p1702) target = $region48
      $region47: #{tpu_custom_call.1} parent=39 // pred_region
        %v1705 = vld [vmem:[#allocation2] sm:$0xff]
        %v1706 = vld [vmem:[#allocation2 + $0x8] sm:$0xff]
        %v1707 = vld [vmem:[#allocation2 + $0x10] sm:$0xff]
        %v1708 = vld [vmem:[#allocation2 + $0x18] sm:$0xff]
        %v1709 = vld [vmem:[#allocation2 + $0x20] sm:$0xff]
        %v1710 = vld [vmem:[#allocation2 + $0x28] sm:$0xff]
        %v1711 = vld [vmem:[#allocation2 + $0x30] sm:$0xff]
        %v1712 = vld [vmem:[#allocation2 + $0x38] sm:$0xff]
        %v1713 = vld [vmem:[#allocation2 + $0x40] sm:$0xff]
        %v1714 = vld [vmem:[#allocation2 + $0x48] sm:$0xff]
        %v1715 = vld [vmem:[#allocation2 + $0x50] sm:$0xff]
        %v1716 = vld [vmem:[#allocation2 + $0x58] sm:$0xff]
        %v1717 = vld [vmem:[#allocation2 + $0x60] sm:$0xff]
        %v1718 = vld [vmem:[#allocation2 + $0x68] sm:$0xff]
        %v1719 = vld [vmem:[#allocation2 + $0x70] sm:$0xff]
        %v1720 = vld [vmem:[#allocation2 + $0x78] sm:$0xff]
        %v1721 = vld [vmem:[#allocation2 + $0x80] sm:$0xff]
        %v1722 = vld [vmem:[#allocation2 + $0x88] sm:$0xff]
        %v1723 = vld [vmem:[#allocation2 + $0x90] sm:$0xff]
        %v1724 = vld [vmem:[#allocation2 + $0x98] sm:$0xff]
        %v1725 = vld [vmem:[#allocation2 + $0xa0] sm:$0xff]
        %v1726 = vld [vmem:[#allocation2 + $0xa8] sm:$0xff]
        %v1727 = vld [vmem:[#allocation2 + $0xb0] sm:$0xff]
        %v1728 = vld [vmem:[#allocation2 + $0xb8] sm:$0xff]
        %v1729 = vld [vmem:[#allocation2 + $0xc0] sm:$0xff]
        %v1730 = vld [vmem:[#allocation2 + $0xc8] sm:$0xff]
        %v1731 = vld [vmem:[#allocation2 + $0xd0] sm:$0xff]
        %v1732 = vld [vmem:[#allocation2 + $0xd8] sm:$0xff]
        %v1733 = vld [vmem:[#allocation2 + $0xe0] sm:$0xff]
        %v1734 = vld [vmem:[#allocation2 + $0xe8] sm:$0xff]
        %v1735 = vld [vmem:[#allocation2 + $0xf0] sm:$0xff]
        %v1736 = vld [vmem:[#allocation2 + $0xf8] sm:$0xff]
        %v1737 = vmax.f32 %v1705, 1e-30
        %v1738 = vmax.f32 %v1706, 1e-30
        %v1739 = vmax.f32 %v1707, 1e-30
        %v1740 = vmax.f32 %v1708, 1e-30
        %v1741 = vmax.f32 %v1709, 1e-30
        %v1742 = vmax.f32 %v1710, 1e-30
        %v1743 = vmax.f32 %v1711, 1e-30
        %v1744 = vmax.f32 %v1712, 1e-30
        %v1745 = vmax.f32 %v1713, 1e-30
        %v1746 = vmax.f32 %v1714, 1e-30
        %v1747 = vmax.f32 %v1715, 1e-30
        %v1748 = vmax.f32 %v1716, 1e-30
        %v1749 = vmax.f32 %v1717, 1e-30
        %v1750 = vmax.f32 %v1718, 1e-30
        %v1751 = vmax.f32 %v1719, 1e-30
        %v1752 = vmax.f32 %v1720, 1e-30
        %v1753 = vmax.f32 %v1721, 1e-30
        %v1754 = vmax.f32 %v1722, 1e-30
        %v1755 = vmax.f32 %v1723, 1e-30
        %v1756 = vmax.f32 %v1724, 1e-30
        %v1757 = vmax.f32 %v1725, 1e-30
        %v1758 = vmax.f32 %v1726, 1e-30
        %v1759 = vmax.f32 %v1727, 1e-30
        %v1760 = vmax.f32 %v1728, 1e-30
        %v1761 = vmax.f32 %v1729, 1e-30
        %v1762 = vmax.f32 %v1730, 1e-30
        %v1763 = vmax.f32 %v1731, 1e-30
        %v1764 = vmax.f32 %v1732, 1e-30
        %v1765 = vmax.f32 %v1733, 1e-30
        %v1766 = vmax.f32 %v1734, 1e-30
        %v1767 = vmax.f32 %v1735, 1e-30
        %v1768 = vmax.f32 %v1736, 1e-30
        %v1769 = vrcp.pop %v1737
        %v1770 = vrcp.pop %v1738
        %v1771 = vrcp.pop %v1739
        %v1772 = vrcp.pop %v1740
        %v1773 = vrcp.pop %v1741
        %v1774 = vrcp.pop %v1742
        %v1775 = vrcp.pop %v1743
        %v1776 = vrcp.pop %v1744
        %v1777 = vrcp.pop %v1745
        %v1778 = vrcp.pop %v1746
        %v1779 = vrcp.pop %v1747
        %v1780 = vrcp.pop %v1748
        %v1781 = vrcp.pop %v1749
        %v1782 = vrcp.pop %v1750
        %v1783 = vrcp.pop %v1751
        %v1784 = vrcp.pop %v1752
        %v1785 = vrcp.pop %v1753
        %v1786 = vrcp.pop %v1754
        %v1787 = vrcp.pop %v1755
        %v1788 = vrcp.pop %v1756
        %v1789 = vrcp.pop %v1757
        %v1790 = vrcp.pop %v1758
        %v1791 = vrcp.pop %v1759
        %v1792 = vrcp.pop %v1760
        %v1793 = vrcp.pop %v1761
        %v1794 = vrcp.pop %v1762
        %v1795 = vrcp.pop %v1763
        %v1796 = vrcp.pop %v1764
        %v1797 = vrcp.pop %v1765
        %v1798 = vrcp.pop %v1766
        %v1799 = vrcp.pop %v1767
        %v1800 = vrcp.pop %v1768
        %1802 = vset.pattern.permute.xlu0 3
        %1803 = vperm.xlu0 %1802, %v1769
        %v1804 = vpop.permute.xlu0 %1803
        %1807 = vset.pattern.permute.xlu0 3
        %1808 = vperm.xlu0 %1807, %v1770
        %v1809 = vpop.permute.xlu0 %1808
        %1812 = vset.pattern.permute.xlu0 3
        %1813 = vperm.xlu0 %1812, %v1771
        %v1814 = vpop.permute.xlu0 %1813
        %1817 = vset.pattern.permute.xlu0 3
        %1818 = vperm.xlu0 %1817, %v1772
        %v1819 = vpop.permute.xlu0 %1818
        %1822 = vset.pattern.permute.xlu0 3
        %1823 = vperm.xlu0 %1822, %v1773
        %v1824 = vpop.permute.xlu0 %1823
        %1827 = vset.pattern.permute.xlu0 3
        %1828 = vperm.xlu0 %1827, %v1774
        %v1829 = vpop.permute.xlu0 %1828
        %1832 = vset.pattern.permute.xlu0 3
        %1833 = vperm.xlu0 %1832, %v1775
        %v1834 = vpop.permute.xlu0 %1833
        %1837 = vset.pattern.permute.xlu0 3
        %1838 = vperm.xlu0 %1837, %v1776
        %v1839 = vpop.permute.xlu0 %1838
        %1842 = vset.pattern.permute.xlu0 3
        %1843 = vperm.xlu0 %1842, %v1777
        %v1844 = vpop.permute.xlu0 %1843
        %1847 = vset.pattern.permute.xlu0 3
        %1848 = vperm.xlu0 %1847, %v1778
        %v1849 = vpop.permute.xlu0 %1848
        %1852 = vset.pattern.permute.xlu0 3
        %1853 = vperm.xlu0 %1852, %v1779
        %v1854 = vpop.permute.xlu0 %1853
        %1857 = vset.pattern.permute.xlu0 3
        %1858 = vperm.xlu0 %1857, %v1780
        %v1859 = vpop.permute.xlu0 %1858
        %1862 = vset.pattern.permute.xlu0 3
        %1863 = vperm.xlu0 %1862, %v1781
        %v1864 = vpop.permute.xlu0 %1863
        %1867 = vset.pattern.permute.xlu0 3
        %1868 = vperm.xlu0 %1867, %v1782
        %v1869 = vpop.permute.xlu0 %1868
        %1872 = vset.pattern.permute.xlu0 3
        %1873 = vperm.xlu0 %1872, %v1783
        %v1874 = vpop.permute.xlu0 %1873
        %1877 = vset.pattern.permute.xlu0 3
        %1878 = vperm.xlu0 %1877, %v1784
        %v1879 = vpop.permute.xlu0 %1878
        %1882 = vset.pattern.permute.xlu0 3
        %1883 = vperm.xlu0 %1882, %v1785
        %v1884 = vpop.permute.xlu0 %1883
        %1887 = vset.pattern.permute.xlu0 3
        %1888 = vperm.xlu0 %1887, %v1786
        %v1889 = vpop.permute.xlu0 %1888
        %1892 = vset.pattern.permute.xlu0 3
        %1893 = vperm.xlu0 %1892, %v1787
        %v1894 = vpop.permute.xlu0 %1893
        %1897 = vset.pattern.permute.xlu0 3
        %1898 = vperm.xlu0 %1897, %v1788
        %v1899 = vpop.permute.xlu0 %1898
        %1902 = vset.pattern.permute.xlu0 3
        %1903 = vperm.xlu0 %1902, %v1789
        %v1904 = vpop.permute.xlu0 %1903
        %1907 = vset.pattern.permute.xlu0 3
        %1908 = vperm.xlu0 %1907, %v1790
        %v1909 = vpop.permute.xlu0 %1908
        %1912 = vset.pattern.permute.xlu0 3
        %1913 = vperm.xlu0 %1912, %v1791
        %v1914 = vpop.permute.xlu0 %1913
        %1917 = vset.pattern.permute.xlu0 3
        %1918 = vperm.xlu0 %1917, %v1792
        %v1919 = vpop.permute.xlu0 %1918
        %1922 = vset.pattern.permute.xlu0 3
        %1923 = vperm.xlu0 %1922, %v1793
        %v1924 = vpop.permute.xlu0 %1923
        %1927 = vset.pattern.permute.xlu0 3
        %1928 = vperm.xlu0 %1927, %v1794
        %v1929 = vpop.permute.xlu0 %1928
        %1932 = vset.pattern.permute.xlu0 3
        %1933 = vperm.xlu0 %1932, %v1795
        %v1934 = vpop.permute.xlu0 %1933
        %1937 = vset.pattern.permute.xlu0 3
        %1938 = vperm.xlu0 %1937, %v1796
        %v1939 = vpop.permute.xlu0 %1938
        %1942 = vset.pattern.permute.xlu0 3
        %1943 = vperm.xlu0 %1942, %v1797
        %v1944 = vpop.permute.xlu0 %1943
        %1947 = vset.pattern.permute.xlu0 3
        %1948 = vperm.xlu0 %1947, %v1798
        %v1949 = vpop.permute.xlu0 %1948
        %1952 = vset.pattern.permute.xlu0 3
        %1953 = vperm.xlu0 %1952, %v1799
        %v1954 = vpop.permute.xlu0 %1953
        %1957 = vset.pattern.permute.xlu0 3
        %1958 = vperm.xlu0 %1957, %v1800
        %v1959 = vpop.permute.xlu0 %1958
        %v1961 = vmul.f32 %v1705, %v1804
        %v1962 = vmul.f32 %v1706, %v1809
        %v1963 = vmul.f32 %v1707, %v1814
        %v1964 = vmul.f32 %v1708, %v1819
        %v1965 = vmul.f32 %v1709, %v1824
        %v1966 = vmul.f32 %v1710, %v1829
        %v1967 = vmul.f32 %v1711, %v1834
        %v1968 = vmul.f32 %v1712, %v1839
        %v1969 = vmul.f32 %v1713, %v1844
        %v1970 = vmul.f32 %v1714, %v1849
        %v1971 = vmul.f32 %v1715, %v1854
        %v1972 = vmul.f32 %v1716, %v1859
        %v1973 = vmul.f32 %v1717, %v1864
        %v1974 = vmul.f32 %v1718, %v1869
        %v1975 = vmul.f32 %v1719, %v1874
        %v1976 = vmul.f32 %v1720, %v1879
        %v1977 = vmul.f32 %v1721, %v1884
        %v1978 = vmul.f32 %v1722, %v1889
        %v1979 = vmul.f32 %v1723, %v1894
        %v1980 = vmul.f32 %v1724, %v1899
        %v1981 = vmul.f32 %v1725, %v1904
        %v1982 = vmul.f32 %v1726, %v1909
        %v1983 = vmul.f32 %v1727, %v1914
        %v1984 = vmul.f32 %v1728, %v1919
        %v1985 = vmul.f32 %v1729, %v1924
        %v1986 = vmul.f32 %v1730, %v1929
        %v1987 = vmul.f32 %v1731, %v1934
        %v1988 = vmul.f32 %v1732, %v1939
        %v1989 = vmul.f32 %v1733, %v1944
        %v1990 = vmul.f32 %v1734, %v1949
        %v1991 = vmul.f32 %v1735, %v1954
        %v1992 = vmul.f32 %v1736, %v1959
        %v1993 = vld [vmem:[%s400] sm:$0xff]
        %v1994 = vld [vmem:[%s400 + $0x8] sm:$0xff]
        %v1995 = vld [vmem:[%s400 + $0x10] sm:$0xff]
        %v1996 = vld [vmem:[%s400 + $0x18] sm:$0xff]
        %v1997 = vld [vmem:[%s400 + $0x20] sm:$0xff]
        %v1998 = vld [vmem:[%s400 + $0x28] sm:$0xff]
        %v1999 = vld [vmem:[%s400 + $0x30] sm:$0xff]
        %v2000 = vld [vmem:[%s400 + $0x38] sm:$0xff]
        %v2001 = vld [vmem:[%s400 + $0x40] sm:$0xff]
        %v2002 = vld [vmem:[%s400 + $0x48] sm:$0xff]
        %v2003 = vld [vmem:[%s400 + $0x50] sm:$0xff]
        %v2004 = vld [vmem:[%s400 + $0x58] sm:$0xff]
        %v2005 = vld [vmem:[%s400 + $0x60] sm:$0xff]
        %v2006 = vld [vmem:[%s400 + $0x68] sm:$0xff]
        %v2007 = vld [vmem:[%s400 + $0x70] sm:$0xff]
        %v2008 = vld [vmem:[%s400 + $0x78] sm:$0xff]
        %v2009 = vld [vmem:[%s400 + $0x80] sm:$0xff]
        %v2010 = vld [vmem:[%s400 + $0x88] sm:$0xff]
        %v2011 = vld [vmem:[%s400 + $0x90] sm:$0xff]
        %v2012 = vld [vmem:[%s400 + $0x98] sm:$0xff]
        %v2013 = vld [vmem:[%s400 + $0xa0] sm:$0xff]
        %v2014 = vld [vmem:[%s400 + $0xa8] sm:$0xff]
        %v2015 = vld [vmem:[%s400 + $0xb0] sm:$0xff]
        %v2016 = vld [vmem:[%s400 + $0xb8] sm:$0xff]
        %v2017 = vld [vmem:[%s400 + $0xc0] sm:$0xff]
        %v2018 = vld [vmem:[%s400 + $0xc8] sm:$0xff]
        %v2019 = vld [vmem:[%s400 + $0xd0] sm:$0xff]
        %v2020 = vld [vmem:[%s400 + $0xd8] sm:$0xff]
        %v2021 = vld [vmem:[%s400 + $0xe0] sm:$0xff]
        %v2022 = vld [vmem:[%s400 + $0xe8] sm:$0xff]
        %v2023 = vld [vmem:[%s400 + $0xf0] sm:$0xff]
        %v2024 = vld [vmem:[%s400 + $0xf8] sm:$0xff]
        %vm2025 = vcmp.gt.f32.partialorder %v1993, 0.0
        %vm2026 = vcmp.gt.f32.partialorder %v1994, 0.0
        %vm2027 = vcmp.gt.f32.partialorder %v1995, 0.0
        %vm2028 = vcmp.gt.f32.partialorder %v1996, 0.0
        %vm2029 = vcmp.gt.f32.partialorder %v1997, 0.0
        %vm2030 = vcmp.gt.f32.partialorder %v1998, 0.0
        %vm2031 = vcmp.gt.f32.partialorder %v1999, 0.0
        %vm2032 = vcmp.gt.f32.partialorder %v2000, 0.0
        %vm2033 = vcmp.gt.f32.partialorder %v2001, 0.0
        %vm2034 = vcmp.gt.f32.partialorder %v2002, 0.0
        %vm2035 = vcmp.gt.f32.partialorder %v2003, 0.0
        %vm2036 = vcmp.gt.f32.partialorder %v2004, 0.0
        %vm2037 = vcmp.gt.f32.partialorder %v2005, 0.0
        %vm2038 = vcmp.gt.f32.partialorder %v2006, 0.0
        %vm2039 = vcmp.gt.f32.partialorder %v2007, 0.0
        %vm2040 = vcmp.gt.f32.partialorder %v2008, 0.0
        %vm2041 = vcmp.gt.f32.partialorder %v2009, 0.0
        %vm2042 = vcmp.gt.f32.partialorder %v2010, 0.0
        %vm2043 = vcmp.gt.f32.partialorder %v2011, 0.0
        %vm2044 = vcmp.gt.f32.partialorder %v2012, 0.0
        %vm2045 = vcmp.gt.f32.partialorder %v2013, 0.0
        %vm2046 = vcmp.gt.f32.partialorder %v2014, 0.0
        %vm2047 = vcmp.gt.f32.partialorder %v2015, 0.0
        %vm2048 = vcmp.gt.f32.partialorder %v2016, 0.0
        %vm2049 = vcmp.gt.f32.partialorder %v2017, 0.0
        %vm2050 = vcmp.gt.f32.partialorder %v2018, 0.0
        %vm2051 = vcmp.gt.f32.partialorder %v2019, 0.0
        %vm2052 = vcmp.gt.f32.partialorder %v2020, 0.0
        %vm2053 = vcmp.gt.f32.partialorder %v2021, 0.0
        %vm2054 = vcmp.gt.f32.partialorder %v2022, 0.0
        %vm2055 = vcmp.gt.f32.partialorder %v2023, 0.0
        %vm2056 = vcmp.gt.f32.partialorder %v2024, 0.0
        %v2057 = vsel %vm2025, 1, 0
        %v2058 = vsel %vm2026, 1, 0
        %v2059 = vsel %vm2027, 1, 0
        %v2060 = vsel %vm2028, 1, 0
        %v2061 = vsel %vm2029, 1, 0
        %v2062 = vsel %vm2030, 1, 0
        %v2063 = vsel %vm2031, 1, 0
        %v2064 = vsel %vm2032, 1, 0
        %v2065 = vsel %vm2033, 1, 0
        %v2066 = vsel %vm2034, 1, 0
        %v2067 = vsel %vm2035, 1, 0
        %v2068 = vsel %vm2036, 1, 0
        %v2069 = vsel %vm2037, 1, 0
        %v2070 = vsel %vm2038, 1, 0
        %v2071 = vsel %vm2039, 1, 0
        %v2072 = vsel %vm2040, 1, 0
        %v2073 = vsel %vm2041, 1, 0
        %v2074 = vsel %vm2042, 1, 0
        %v2075 = vsel %vm2043, 1, 0
        %v2076 = vsel %vm2044, 1, 0
        %v2077 = vsel %vm2045, 1, 0
        %v2078 = vsel %vm2046, 1, 0
        %v2079 = vsel %vm2047, 1, 0
        %v2080 = vsel %vm2048, 1, 0
        %v2081 = vsel %vm2049, 1, 0
        %v2082 = vsel %vm2050, 1, 0
        %v2083 = vsel %vm2051, 1, 0
        %v2084 = vsel %vm2052, 1, 0
        %v2085 = vsel %vm2053, 1, 0
        %v2086 = vsel %vm2054, 1, 0
        %v2087 = vsel %vm2055, 1, 0
        %v2088 = vsel %vm2056, 1, 0
        %2089 = vset.pattern.permute.xlu0 0
        %2090 = vperm.xlu0 %2089, %v2057
        %v2091 = vpop.permute.xlu0 %2090
        %2092 = vset.pattern.permute.xlu0 0
        %2093 = vperm.xlu0 %2092, %v2058
        %v2094 = vpop.permute.xlu0 %2093
        %2095 = vset.pattern.permute.xlu0 0
        %2096 = vperm.xlu0 %2095, %v2059
        %v2097 = vpop.permute.xlu0 %2096
        %2098 = vset.pattern.permute.xlu0 0
        %2099 = vperm.xlu0 %2098, %v2060
        %v2100 = vpop.permute.xlu0 %2099
        %2101 = vset.pattern.permute.xlu0 0
        %2102 = vperm.xlu0 %2101, %v2061
        %v2103 = vpop.permute.xlu0 %2102
        %2104 = vset.pattern.permute.xlu0 0
        %2105 = vperm.xlu0 %2104, %v2062
        %v2106 = vpop.permute.xlu0 %2105
        %2107 = vset.pattern.permute.xlu0 0
        %2108 = vperm.xlu0 %2107, %v2063
        %v2109 = vpop.permute.xlu0 %2108
        %2110 = vset.pattern.permute.xlu0 0
        %2111 = vperm.xlu0 %2110, %v2064
        %v2112 = vpop.permute.xlu0 %2111
        %2113 = vset.pattern.permute.xlu0 0
        %2114 = vperm.xlu0 %2113, %v2065
        %v2115 = vpop.permute.xlu0 %2114
        %2116 = vset.pattern.permute.xlu0 0
        %2117 = vperm.xlu0 %2116, %v2066
        %v2118 = vpop.permute.xlu0 %2117
        %2119 = vset.pattern.permute.xlu0 0
        %2120 = vperm.xlu0 %2119, %v2067
        %v2121 = vpop.permute.xlu0 %2120
        %2122 = vset.pattern.permute.xlu0 0
        %2123 = vperm.xlu0 %2122, %v2068
        %v2124 = vpop.permute.xlu0 %2123
        %2125 = vset.pattern.permute.xlu0 0
        %2126 = vperm.xlu0 %2125, %v2069
        %v2127 = vpop.permute.xlu0 %2126
        %2128 = vset.pattern.permute.xlu0 0
        %2129 = vperm.xlu0 %2128, %v2070
        %v2130 = vpop.permute.xlu0 %2129
        %2131 = vset.pattern.permute.xlu0 0
        %2132 = vperm.xlu0 %2131, %v2071
        %v2133 = vpop.permute.xlu0 %2132
        %2134 = vset.pattern.permute.xlu0 0
        %2135 = vperm.xlu0 %2134, %v2072
        %v2136 = vpop.permute.xlu0 %2135
        %2137 = vset.pattern.permute.xlu0 0
        %2138 = vperm.xlu0 %2137, %v2073
        %v2139 = vpop.permute.xlu0 %2138
        %2140 = vset.pattern.permute.xlu0 0
        %2141 = vperm.xlu0 %2140, %v2074
        %v2142 = vpop.permute.xlu0 %2141
        %2143 = vset.pattern.permute.xlu0 0
        %2144 = vperm.xlu0 %2143, %v2075
        %v2145 = vpop.permute.xlu0 %2144
        %2146 = vset.pattern.permute.xlu0 0
        %2147 = vperm.xlu0 %2146, %v2076
        %v2148 = vpop.permute.xlu0 %2147
        %2149 = vset.pattern.permute.xlu0 0
        %2150 = vperm.xlu0 %2149, %v2077
        %v2151 = vpop.permute.xlu0 %2150
        %2152 = vset.pattern.permute.xlu0 0
        %2153 = vperm.xlu0 %2152, %v2078
        %v2154 = vpop.permute.xlu0 %2153
        %2155 = vset.pattern.permute.xlu0 0
        %2156 = vperm.xlu0 %2155, %v2079
        %v2157 = vpop.permute.xlu0 %2156
        %2158 = vset.pattern.permute.xlu0 0
        %2159 = vperm.xlu0 %2158, %v2080
        %v2160 = vpop.permute.xlu0 %2159
        %2161 = vset.pattern.permute.xlu0 0
        %2162 = vperm.xlu0 %2161, %v2081
        %v2163 = vpop.permute.xlu0 %2162
        %2164 = vset.pattern.permute.xlu0 0
        %2165 = vperm.xlu0 %2164, %v2082
        %v2166 = vpop.permute.xlu0 %2165
        %2167 = vset.pattern.permute.xlu0 0
        %2168 = vperm.xlu0 %2167, %v2083
        %v2169 = vpop.permute.xlu0 %2168
        %2170 = vset.pattern.permute.xlu0 0
        %2171 = vperm.xlu0 %2170, %v2084
        %v2172 = vpop.permute.xlu0 %2171
        %2173 = vset.pattern.permute.xlu0 0
        %2174 = vperm.xlu0 %2173, %v2085
        %v2175 = vpop.permute.xlu0 %2174
        %2176 = vset.pattern.permute.xlu0 0
        %2177 = vperm.xlu0 %2176, %v2086
        %v2178 = vpop.permute.xlu0 %2177
        %2179 = vset.pattern.permute.xlu0 0
        %2180 = vperm.xlu0 %2179, %v2087
        %v2181 = vpop.permute.xlu0 %2180
        %2182 = vset.pattern.permute.xlu0 0
        %2183 = vperm.xlu0 %2182, %v2088
        %v2184 = vpop.permute.xlu0 %2183
        %vm2185 = vcmp.eq.s32.totalorder %v2091, 1
        %vm2186 = vcmp.eq.s32.totalorder %v2094, 1
        %vm2187 = vcmp.eq.s32.totalorder %v2097, 1
        %vm2188 = vcmp.eq.s32.totalorder %v2100, 1
        %vm2189 = vcmp.eq.s32.totalorder %v2103, 1
        %vm2190 = vcmp.eq.s32.totalorder %v2106, 1
        %vm2191 = vcmp.eq.s32.totalorder %v2109, 1
        %vm2192 = vcmp.eq.s32.totalorder %v2112, 1
        %vm2193 = vcmp.eq.s32.totalorder %v2115, 1
        %vm2194 = vcmp.eq.s32.totalorder %v2118, 1
        %vm2195 = vcmp.eq.s32.totalorder %v2121, 1
        %vm2196 = vcmp.eq.s32.totalorder %v2124, 1
        %vm2197 = vcmp.eq.s32.totalorder %v2127, 1
        %vm2198 = vcmp.eq.s32.totalorder %v2130, 1
        %vm2199 = vcmp.eq.s32.totalorder %v2133, 1
        %vm2200 = vcmp.eq.s32.totalorder %v2136, 1
        %vm2201 = vcmp.eq.s32.totalorder %v2139, 1
        %vm2202 = vcmp.eq.s32.totalorder %v2142, 1
        %vm2203 = vcmp.eq.s32.totalorder %v2145, 1
        %vm2204 = vcmp.eq.s32.totalorder %v2148, 1
        %vm2205 = vcmp.eq.s32.totalorder %v2151, 1
        %vm2206 = vcmp.eq.s32.totalorder %v2154, 1
        %vm2207 = vcmp.eq.s32.totalorder %v2157, 1
        %vm2208 = vcmp.eq.s32.totalorder %v2160, 1
        %vm2209 = vcmp.eq.s32.totalorder %v2163, 1
        %vm2210 = vcmp.eq.s32.totalorder %v2166, 1
        %vm2211 = vcmp.eq.s32.totalorder %v2169, 1
        %vm2212 = vcmp.eq.s32.totalorder %v2172, 1
        %vm2213 = vcmp.eq.s32.totalorder %v2175, 1
        %vm2214 = vcmp.eq.s32.totalorder %v2178, 1
        %vm2215 = vcmp.eq.s32.totalorder %v2181, 1
        %vm2216 = vcmp.eq.s32.totalorder %v2184, 1
        %v2217 = vsel %vm2185, %v1961, -1.0
        %v2218 = vsel %vm2186, %v1962, -1.0
        %v2219 = vsel %vm2187, %v1963, -1.0
        %v2220 = vsel %vm2188, %v1964, -1.0
        %v2221 = vsel %vm2189, %v1965, -1.0
        %v2222 = vsel %vm2190, %v1966, -1.0
        %v2223 = vsel %vm2191, %v1967, -1.0
        %v2224 = vsel %vm2192, %v1968, -1.0
        %v2225 = vsel %vm2193, %v1969, -1.0
        %v2226 = vsel %vm2194, %v1970, -1.0
        %v2227 = vsel %vm2195, %v1971, -1.0
        %v2228 = vsel %vm2196, %v1972, -1.0
        %v2229 = vsel %vm2197, %v1973, -1.0
        %v2230 = vsel %vm2198, %v1974, -1.0
        %v2231 = vsel %vm2199, %v1975, -1.0
        %v2232 = vsel %vm2200, %v1976, -1.0
        %v2233 = vsel %vm2201, %v1977, -1.0
        %v2234 = vsel %vm2202, %v1978, -1.0
        %v2235 = vsel %vm2203, %v1979, -1.0
        %v2236 = vsel %vm2204, %v1980, -1.0
        %v2237 = vsel %vm2205, %v1981, -1.0
        %v2238 = vsel %vm2206, %v1982, -1.0
        %v2239 = vsel %vm2207, %v1983, -1.0
        %v2240 = vsel %vm2208, %v1984, -1.0
        %v2241 = vsel %vm2209, %v1985, -1.0
        %v2242 = vsel %vm2210, %v1986, -1.0
        %v2243 = vsel %vm2211, %v1987, -1.0
        %v2244 = vsel %vm2212, %v1988, -1.0
        %v2245 = vsel %vm2213, %v1989, -1.0
        %v2246 = vsel %vm2214, %v1990, -1.0
        %v2247 = vsel %vm2215, %v1991, -1.0
        %v2248 = vsel %vm2216, %v1992, -1.0
        %vm2249 = vcmask 23552
        %2250 = vst.msk [vmem:[%s410] sm:$0xff] %vm2249, %v2217
        %2251 = vst.msk [vmem:[%s410 + $0x8] sm:$0xff] %vm2249, %v2218
        %2252 = vst.msk [vmem:[%s410 + $0x10] sm:$0xff] %vm2249, %v2219
        %2253 = vst.msk [vmem:[%s410 + $0x18] sm:$0xff] %vm2249, %v2220
        %2254 = vst.msk [vmem:[%s410 + $0x20] sm:$0xff] %vm2249, %v2221
        %2255 = vst.msk [vmem:[%s410 + $0x28] sm:$0xff] %vm2249, %v2222
        %2256 = vst.msk [vmem:[%s410 + $0x30] sm:$0xff] %vm2249, %v2223
        %2257 = vst.msk [vmem:[%s410 + $0x38] sm:$0xff] %vm2249, %v2224
        %2258 = vst.msk [vmem:[%s410 + $0x40] sm:$0xff] %vm2249, %v2225
        %2259 = vst.msk [vmem:[%s410 + $0x48] sm:$0xff] %vm2249, %v2226
        %2260 = vst.msk [vmem:[%s410 + $0x50] sm:$0xff] %vm2249, %v2227
        %2261 = vst.msk [vmem:[%s410 + $0x58] sm:$0xff] %vm2249, %v2228
        %2262 = vst.msk [vmem:[%s410 + $0x60] sm:$0xff] %vm2249, %v2229
        %2263 = vst.msk [vmem:[%s410 + $0x68] sm:$0xff] %vm2249, %v2230
        %2264 = vst.msk [vmem:[%s410 + $0x70] sm:$0xff] %vm2249, %v2231
        %2265 = vst.msk [vmem:[%s410 + $0x78] sm:$0xff] %vm2249, %v2232
        %2266 = vst.msk [vmem:[%s410 + $0x80] sm:$0xff] %vm2249, %v2233
        %2267 = vst.msk [vmem:[%s410 + $0x88] sm:$0xff] %vm2249, %v2234
        %2268 = vst.msk [vmem:[%s410 + $0x90] sm:$0xff] %vm2249, %v2235
        %2269 = vst.msk [vmem:[%s410 + $0x98] sm:$0xff] %vm2249, %v2236
        %2270 = vst.msk [vmem:[%s410 + $0xa0] sm:$0xff] %vm2249, %v2237
        %2271 = vst.msk [vmem:[%s410 + $0xa8] sm:$0xff] %vm2249, %v2238
        %2272 = vst.msk [vmem:[%s410 + $0xb0] sm:$0xff] %vm2249, %v2239
        %2273 = vst.msk [vmem:[%s410 + $0xb8] sm:$0xff] %vm2249, %v2240
        %2274 = vst.msk [vmem:[%s410 + $0xc0] sm:$0xff] %vm2249, %v2241
        %2275 = vst.msk [vmem:[%s410 + $0xc8] sm:$0xff] %vm2249, %v2242
        %2276 = vst.msk [vmem:[%s410 + $0xd0] sm:$0xff] %vm2249, %v2243
        %2277 = vst.msk [vmem:[%s410 + $0xd8] sm:$0xff] %vm2249, %v2244
        %2278 = vst.msk [vmem:[%s410 + $0xe0] sm:$0xff] %vm2249, %v2245
        %2279 = vst.msk [vmem:[%s410 + $0xe8] sm:$0xff] %vm2249, %v2246
        %2280 = vst.msk [vmem:[%s410 + $0xf0] sm:$0xff] %vm2249, %v2247
        %2281 = vst.msk [vmem:[%s410 + $0xf8] sm:$0xff] %vm2249, %v2248
      $region48: #{tpu_custom_call.1} parent=39 // pred_fallthru
        _
      %s2282 = smul.u32 32, %s22
      %p2283 = scmp.lt.s32.totalorder %s21, 1
      %s2284 = scalar_select %p2283, %s21, 1
      %p2285 = scmp.lt.s32.totalorder %s2282, 31
      %s2286 = scalar_select %p2285, %s2282, 31
      %s2287 = smul.addr %s2284, 32
      %s2288 = sadd.s32 %s2286, %s2287
      %s2289 = smul.addr %s2288, 8
      %s2290 = scalar_lea.vmem %s5, %s2289
      // Predicated region
      $region49: #{tpu_custom_call.1} parent=39 // pred_check
        %p2291 = pneg %p195
      $region50: #{tpu_custom_call.1} parent=39 // pred_check_branch
        %2293 = sbr.rel (%p2291) target = $region52
      $region51: #{tpu_custom_call.1} parent=39 // pred_region
        %s2294 = smul.u32 32, %s22
      $region52: #{tpu_custom_call.1} parent=39 // pred_fallthru
        _
    $region40: #{tpu_custom_call.1} parent=5 // pred_fallthru
      _
    %p2295 = scmp.le.s32.totalorder 2, %s11
    // Predicated region
    $region53: #{tpu_custom_call.1} parent=5 // pred_check
      %p2296 = pneg %p2295
    $region54: #{tpu_custom_call.1} parent=5 // pred_check_branch
      %2298 = sbr.rel (%p2296) target = $region56
    $region55: #{tpu_custom_call.1} parent=5 // pred_region
      %s2299 = ssub.s32 %s11, 2
      // Predicated region
      $region57: #{tpu_custom_call.1} parent=55 // pred_check
        %p2300 = pneg %p201
      $region58: #{tpu_custom_call.1} parent=55 // pred_check_branch
        %2302 = sbr.rel (%p2300) target = $region60
      $region59: #{tpu_custom_call.1} parent=55 // pred_region
        %s2303 = smul.u32 32, %s25
        %p2304 = scmp.lt.s32.totalorder %s24, 1
        %s2305 = scalar_select %p2304, %s24, 1
        %p2306 = scmp.lt.s32.totalorder %s2303, 31
        %s2307 = scalar_select %p2306, %s2303, 31
        %s2308 = smul.addr %s2305, 32
        %s2309 = sadd.s32 %s2307, %s2308
        %s2310 = smul.addr %s2309, 8
        %s2311 = scalar_lea.vmem %s5, %s2310
      $region60: #{tpu_custom_call.1} parent=55 // pred_fallthru
        _
    $region56: #{tpu_custom_call.1} parent=5 // pred_fallthru
      _
  $region6: #{tpu_custom_call.1} parent=0 // loop_footer
    %s15 = sadd.s32 1, %s11
  $region7: #{tpu_custom_call.1} parent=0 // loop_footer_branch
    %10 = sbr.rel target = $region3
  $region8: #{tpu_custom_call.1} parent=0 // loop_exit
    _

</llo_original>
